<compile_context>
chip_gen: v5e
topology: v5e:2x2
jax: 0.10.0
libtpu: 0.0.40
codegen_flags: <defaults>
</compile_context>

<pallas_src>
import functools

import jax
import jax.numpy as jnp
from jax.experimental import pallas as pl
from jax.experimental.pallas import tpu as pltpu


# ---------------------------------------------------------------------------
# Kernels
# ---------------------------------------------------------------------------

def _nbeats_resident_kernel(TB, NH, E, unroll,
                            x_ref, w0_ref, wh_ref, wbf_ref, gb_ref, gf_ref,
                            b_ref, out_ref):
    """All weights VMEM-resident.  Block loop is either a static unroll
    (small TB) or a fori_loop with dynamic leading-axis weight indexing."""
    f32, bf16 = jnp.float32, jnp.bfloat16
    n_in = x_ref.shape[1]
    n_out = out_ref.shape[1]
    LW = w0_ref.shape[2]

    def block_step(t, carry):
        backcast, forecast = carry
        bt = b_ref[t]                                   # (NH + 4, PW) f32

        # FC stack: Linear + ReLU.  bf16 operands -> native MXU path,
        # f32 accumulate.
        h = jnp.maximum(
            jnp.dot(backcast.astype(bf16), w0_ref[t],
                    preferred_element_type=f32) + bt[0:1, :LW], 0.0)
        for l in range(NH):                              # NH is small: unrolled
            h = jnp.maximum(
                jnp.dot(h.astype(bf16), wh_ref[t * NH + l],
                        preferred_element_type=f32) + bt[1 + l:2 + l, :LW], 0.0)

        # Fused backcast|forecast expansion coefficients (one matmul).
        ef = jnp.dot(h.astype(bf16), wbf_ref[t],
                     preferred_element_type=f32) + bt[NH + 1:NH + 2, :2 * E]
        be = ef[:, :E].astype(bf16)
        fe = ef[:, E:].astype(bf16)

        backcast = backcast - (jnp.dot(be, gb_ref[t], preferred_element_type=f32)
                               + bt[NH + 2:NH + 3, :n_in])
        forecast = forecast + (jnp.dot(fe, gf_ref[t], preferred_element_type=f32)
                               + bt[NH + 3:NH + 4, :n_out])
        return backcast, forecast

    backcast = x_ref[...].astype(f32)
    forecast = jnp.zeros(out_ref.shape, f32)
    if unroll:
        for t in range(TB):
            backcast, forecast = block_step(t, (backcast, forecast))
    else:
        backcast, forecast = jax.lax.fori_loop(0, TB, block_step,
                                               (backcast, forecast))
    out_ref[...] = forecast.astype(out_ref.dtype)


def _nbeats_stream_kernel(NH, E, offs, LW,
                          x_ref, blob_ref, b_ref, out_ref, bc_scr, fc_scr):
    """Streaming kernel: grid = (batch_tiles, TB).  All per-block weights
    arrive as a single packed bf16 blob; backcast residual / forecast
    accumulator carried in f32 VMEM scratch across the block axis."""
    f32, bf16 = jnp.float32, jnp.bfloat16
    n_in = bc_scr.shape[1]
    n_out = fc_scr.shape[1]
    t = pl.program_id(1)
    off_w0, offs_wh, off_wbf, off_gb, off_gf = offs

    @pl.when(t == 0)
    def _():
        bc_scr[...] = x_ref[...].astype(f32)
        fc_scr[...] = jnp.zeros_like(fc_scr)

    bt = b_ref[0]                                        # (NH + 4, PW) f32

    w0 = blob_ref[0, off_w0:off_w0 + n_in, :LW]
    h = jnp.maximum(
        jnp.dot(bc_scr[...].astype(bf16), w0,
                preferred_element_type=f32) + bt[0:1, :LW], 0.0)
    for l in range(NH):
        wl = blob_ref[0, offs_wh[l]:offs_wh[l] + LW, :LW]
        h = jnp.maximum(
            jnp.dot(h.astype(bf16), wl,
                    preferred_element_type=f32) + bt[1 + l:2 + l, :LW], 0.0)

    wbf = blob_ref[0, off_wbf:off_wbf + LW, :2 * E]
    ef = jnp.dot(h.astype(bf16), wbf,
                 preferred_element_type=f32) + bt[NH + 1:NH + 2, :2 * E]
    be = ef[:, :E].astype(bf16)
    fe = ef[:, E:].astype(bf16)

    gb = blob_ref[0, off_gb:off_gb + E, :n_in]
    gf = blob_ref[0, off_gf:off_gf + E, :n_out]
    bc_scr[...] = bc_scr[...] - (jnp.dot(be, gb, preferred_element_type=f32)
                                 + bt[NH + 2:NH + 3, :n_in])
    fc_scr[...] = fc_scr[...] + (jnp.dot(fe, gf, preferred_element_type=f32)
                                 + bt[NH + 3:NH + 4, :n_out])

    # Output block index is constant along t (accumulator pattern, P3).
    @pl.when(t == pl.num_programs(1) - 1)
    def _():
        out_ref[...] = fc_scr[...].astype(out_ref.dtype)


# ---------------------------------------------------------------------------
# Helpers
# ---------------------------------------------------------------------------

def _vmem_capacity_bytes():
    try:
        info = pltpu.get_tpu_info()
        cap = getattr(info, "vmem_capacity_bytes", None)
        if cap:
            return int(cap)
    except Exception:
        pass
    return 64 << 20  # conservative default (v7x per-TensorCore)


def _maybe_buffered(shape, index_map, depth):
    """BlockSpec with pipeline depth `depth`, falling back to default (2)."""
    if depth is None or depth <= 2:
        return pl.BlockSpec(shape, index_map)
    try:
        return pl.BlockSpec(shape, index_map, pipeline_mode=pl.Buffered(depth))
    except TypeError:
        return pl.BlockSpec(shape, index_map)


def _round16(v):
    return (v + 15) // 16 * 16


def _pack_stream_blob(params):
    """Pack W0|Wh|Wbf|Gb|Gf into one (TB, R, PC) bf16 blob per block.
    Each segment's row offset is 16-aligned (bf16 sublane pack)."""
    W0, Wh, Wbf = params["W0"], params["Wh"], params["Wbf"]
    Gb, Gf = params["Gb"], params["Gf"]
    TB, n_in, LW = W0.shape
    NH = Wh.shape[1]
    E2 = Wbf.shape[2]
    E = E2 // 2
    n_out = Gf.shape[2]
    PC = max(LW, E2, n_in, n_out)

    offs_wh = []
    off = 0
    off_w0 = off
    off += _round16(n_in)
    for _ in range(NH):
        offs_wh.append(off)
        off += _round16(LW)
    off_wbf = off
    off += _round16(LW)
    off_gb = off
    off += _round16(E)
    off_gf = off
    off += _round16(E)
    R = off

    def pad(mat, rows):
        r, c = mat.shape
        return jnp.pad(mat, ((0, rows - r), (0, PC - c)))

    blobs = []
    for t in range(TB):
        pieces = [pad(W0[t], _round16(n_in))]
        for l in range(NH):
            pieces.append(pad(Wh[t, l], _round16(LW)))
        pieces.append(pad(Wbf[t], _round16(LW)))
        pieces.append(pad(Gb[t], _round16(E)))
        pieces.append(pad(Gf[t], _round16(E)))
        blobs.append(jnp.concatenate(pieces, axis=0))
    blob = jnp.stack(blobs)                                # (TB, R, PC) bf16
    assert blob.shape == (TB, R, PC)
    offs = (off_w0, tuple(offs_wh), off_wbf, off_gb, off_gf)
    return blob, offs


# ---------------------------------------------------------------------------
# Wrapper
# ---------------------------------------------------------------------------

def nbeats_forward(x, params, n_out, *, streaming=None, batch_block=None,
                   buffer_depth=3):
    B, n_in = x.shape
    W0, Wh, Wbf = params["W0"], params["Wh"], params["Wbf"]
    Gb, Gf, Bia = params["Gb"], params["Gf"], params["bias"]
    TB, _, LW = W0.shape
    NH = Wh.shape[1]
    E = Wbf.shape[2] // 2
    PW = Bia.shape[2]

    # Batch tiling (megacore parallelism on v7x; also bounds activation VMEM).
    if batch_block is None:
        batch_block = B if B <= 256 else 256
    if B % batch_block != 0 or (batch_block != B and batch_block % 8 != 0):
        batch_block = B
    nb = B // batch_block

    # Generation-aware VMEM budgeting (full ~120 MiB on v5e/v6e, ~56 on v7x).
    vmem_cap = _vmem_capacity_bytes()
    vmem_clamp = max(vmem_cap - (8 << 20), 32 << 20)
    resident_threshold = max(vmem_clamp - (16 << 20), 24 << 20)

    total_param_bytes = sum(int(a.size) * a.dtype.itemsize
                            for a in (W0, Wh, Wbf, Gb, Gf, Bia))
    # Gridded resident path presents full-shape weight blocks which may be
    # double-buffered; budget 2x weights in that case.
    weight_factor = 2 if nb > 1 else 1
    act_bytes = 4 * batch_block * (2 * n_in + 2 * n_out + LW + 2 * E) + (1 << 20)
    resident_need = weight_factor * total_param_bytes + act_bytes

    if streaming is None:
        streaming = resident_need > resident_threshold

    if not streaming:
        Wh2 = Wh.reshape(TB * NH, LW, LW)   # flat block axis -> single dyn index
        kernel = functools.partial(_nbeats_resident_kernel, TB, NH, E, TB <= 8)
        vmem_limit = int(min(max(resident_need + (8 << 20), 32 << 20),
                             vmem_clamp))
        if nb == 1:
            vmem = pl.BlockSpec(memory_space=pltpu.MemorySpace.VMEM)
            return pl.pallas_call(
                kernel,
                out_shape=jax.ShapeDtypeStruct((B, n_out), x.dtype),
                in_specs=[vmem] * 7,
                out_specs=vmem,
                compiler_params=pltpu.CompilerParams(
                    vmem_limit_bytes=vmem_limit),
            )(x, W0, Wh2, Wbf, Gb, Gf, Bia)

        # Batch-parallel grid: weights resident (constant block index), x/out
        # tiled along B so the two v7x TensorCores split the batch.
        grid_spec = pltpu.PrefetchScalarGridSpec(
            num_scalar_prefetch=0,
            grid=(nb,),
            in_specs=[
                pl.BlockSpec((batch_block, n_in), lambda i: (i, 0)),
                pl.BlockSpec(W0.shape, lambda i: (0, 0, 0)),
                pl.BlockSpec(Wh2.shape, lambda i: (0, 0, 0)),
                pl.BlockSpec(Wbf.shape, lambda i: (0, 0, 0)),
                pl.BlockSpec(Gb.shape, lambda i: (0, 0, 0)),
                pl.BlockSpec(Gf.shape, lambda i: (0, 0, 0)),
                pl.BlockSpec(Bia.shape, lambda i: (0, 0, 0)),
            ],
            out_specs=pl.BlockSpec((batch_block, n_out), lambda i: (i, 0)),
        )
        return pl.pallas_call(
            kernel,
            out_shape=jax.ShapeDtypeStruct((B, n_out), x.dtype),
            grid_spec=grid_spec,
            compiler_params=pltpu.CompilerParams(
                dimension_semantics=("parallel",),
                vmem_limit_bytes=vmem_limit),
        )(x, W0, Wh2, Wbf, Gb, Gf, Bia)

    # ------------------------- Streaming path -----------------------------
    blob, offs = _pack_stream_blob(params)
    R, PC = blob.shape[1], blob.shape[2]
    depth = max(int(buffer_depth), 2)
    stream_bytes = depth * (R * PC * blob.dtype.itemsize
                            + (NH + 4) * PW * Bia.dtype.itemsize)
    io_bytes = 3 * 4 * batch_block * (n_in + n_out)   # x/out buffers + scratch
    vmem_limit = int(min(max(stream_bytes + io_bytes + (16 << 20), 32 << 20),
                         vmem_clamp))

    kernel = functools.partial(_nbeats_stream_kernel, NH, E, offs, LW)
    grid_spec = pltpu.PrefetchScalarGridSpec(
        num_scalar_prefetch=0,
        grid=(nb, TB),
        in_specs=[
            pl.BlockSpec((batch_block, n_in), lambda b, t: (b, 0)),     # x
            _maybe_buffered((1, R, PC), lambda b, t: (t, 0, 0), depth),  # blob
            _maybe_buffered((1, NH + 4, PW), lambda b, t: (t, 0, 0), depth),
        ],
        out_specs=pl.BlockSpec((batch_block, n_out), lambda b, t: (b, 0)),
        scratch_shapes=[
            pltpu.VMEM((batch_block, n_in), jnp.float32),   # backcast residual
            pltpu.VMEM((batch_block, n_out), jnp.float32),  # forecast accum
        ],
    )
    return pl.pallas_call(
        kernel,
        out_shape=jax.ShapeDtypeStruct((B, n_out), x.dtype),
        grid_spec=grid_spec,
        compiler_params=pltpu.CompilerParams(
            dimension_semantics=("parallel", "arbitrary"),
            vmem_limit_bytes=vmem_limit),
    )(x, blob, Bia)


# ---------------------------------------------------------------------------
# Plain-JAX reference (same bf16-operand / f32-accumulate numerics)
# ---------------------------------------------------------------------------

def nbeats_reference(x, params, n_out):
    f32, bf16 = jnp.float32, jnp.bfloat16
    W0, Wh, Wbf = params["W0"], params["Wh"], params["Wbf"]
    Gb, Gf, Bia = params["Gb"], params["Gf"], params["bias"]
    TB, n_in, LW = W0.shape
    NH = Wh.shape[1]
    E = Wbf.shape[2] // 2

    def mm(a, w):
        return jnp.dot(a.astype(bf16), w, preferred_element_type=f32)

    backcast = x.astype(f32)
    forecast = jnp.zeros((x.shape[0], n_out), f32)
    for t in range(TB):
        h = jnp.maximum(mm(backcast, W0[t]) + Bia[t, 0, :LW], 0.0)
        for l in range(NH):
            h = jnp.maximum(mm(h, Wh[t, l]) + Bia[t, 1 + l, :LW], 0.0)
        ef = mm(h, Wbf[t]) + Bia[t, NH + 1, :2 * E]
        be, fe = ef[:, :E], ef[:, E:]
        backcast = backcast - (mm(be, Gb[t]) + Bia[t, NH + 2, :n_in])
        forecast = forecast + (mm(fe, Gf[t]) + Bia[t, NH + 3, :n_out])
    return forecast.astype(x.dtype)


# ---------------------------------------------------------------------------
# Parameter construction (PyTorch nn.Linear-style init, packed layout)
# ---------------------------------------------------------------------------

def init_params(key, n_in, n_out, n_stacks, n_blocks, n_layers, exp_dim,
                layer_width, weight_dtype=jnp.bfloat16):
    assert n_layers >= 2, "this setup assumes at least one hidden FC layer"
    TB = n_stacks * n_blocks
    NH = n_layers - 1
    PW = max(layer_width, 2 * exp_dim, n_in, n_out)

    def lin(k, fi, fo):
        kw, kb = jax.random.split(k)
        bound = 1.0 / (fi ** 0.5)
        W = jax.random.uniform(kw, (fi, fo), jnp.float32, -bound, bound)
        b = jax.random.uniform(kb, (fo,), jnp.float32, -bound, bound)
        return W, b

    def pad_row(b):
        return jnp.pad(b, (0, PW - b.shape[0]))[None, :]

    W0l, Whl, Wbfl, Gbl, Gfl, Bl = [], [], [], [], [], []
    keys = jax.random.split(key, TB)
    for t in range(TB):
        ks = jax.random.split(keys[t], 5 + NH)
        w0, b0 = lin(ks[0], n_in, layer_width)
        whs, bhs = [], []
        for l in range(NH):
            w, b = lin(ks[1 + l], layer_width, layer_width)
            whs.append(w)
            bhs.append(b)
        wb, bb = lin(ks[1 + NH], layer_width, exp_dim)
        wf, bf = lin(ks[2 + NH], layer_width, exp_dim)
        gb, gbb = lin(ks[3 + NH], exp_dim, n_in)
        gf, gfb = lin(ks[4 + NH], exp_dim, n_out)

        W0l.append(w0)
        Whl.append(jnp.stack(whs))
        Wbfl.append(jnp.concatenate([wb, wf], axis=1))       # (LW, 2E)
        Gbl.append(gb)
        Gfl.append(gf)
        bias_rows = ([pad_row(b0)] + [pad_row(b) for b in bhs]
                     + [pad_row(jnp.concatenate([bb, bf]))]
                     + [pad_row(gbb)] + [pad_row(gfb)])
        Bl.append(jnp.concatenate(bias_rows, axis=0))         # (NH+4, PW)

    st = jnp.stack
    return dict(W0=st(W0l).astype(weight_dtype),
                Wh=st(Whl).astype(weight_dtype),
                Wbf=st(Wbfl).astype(weight_dtype),
                Gb=st(Gbl).astype(weight_dtype),
                Gf=st(Gfl).astype(weight_dtype),
                bias=st(Bl))                                   # biases f32


if __name__ == "__main__":
    key = jax.random.PRNGKey(0)

    # --- Config 1: small demo (unrolled resident kernel, single batch tile) ---
    B, n_in, n_out = 2, 8, 8
    n_stacks, n_blocks, n_layers = 2, 3, 2
    exp_dim, layer_width = 8, 32
    k_x, k_p, key = jax.random.split(key, 3)
    x = jax.random.normal(k_x, (B, n_in), dtype=jnp.float32)
    params = init_params(k_p, n_in, n_out, n_stacks, n_blocks, n_layers,
                         exp_dim, layer_width)
    ref = nbeats_reference(x, params, n_out)

    out_res = jax.block_until_ready(
        nbeats_forward(x, params, n_out, streaming=False))
    assert out_res.shape == (B, n_out)
    assert jnp.allclose(out_res, ref, rtol=1e-2, atol=1e-2)

    out_str = jax.block_until_ready(
        nbeats_forward(x, params, n_out, streaming=True))
    assert jnp.allclose(out_str, ref, rtol=1e-2, atol=1e-2)

    # --- Config 2: fori_loop block loop + batch-parallel grid (v7x megacore) ---
    B2, n_in2, n_out2 = 32, 24, 12
    n_stacks2, n_blocks2, n_layers2 = 3, 4, 3
    exp_dim2, layer_width2 = 16, 64
    k_x2, k_p2, key = jax.random.split(key, 3)
    x2 = jax.random.normal(k_x2, (B2, n_in2), dtype=jnp.float32)
    params2 = init_params(k_p2, n_in2, n_out2, n_stacks2, n_blocks2, n_layers2,
                          exp_dim2, layer_width2)
    ref2 = nbeats_reference(x2, params2, n_out2)

    out2_res = jax.block_until_ready(
        nbeats_forward(x2, params2, n_out2, streaming=False, batch_block=16))
    assert jnp.allclose(out2_res, ref2, rtol=1e-2, atol=1e-2)

    out2_str = jax.block_until_ready(
        nbeats_forward(x2, params2, n_out2, streaming=True, batch_block=16))
    assert jnp.allclose(out2_str, ref2, rtol=1e-2, atol=1e-2)

    print("KERNEL_OK")
</pallas_src>

<mosaic_0001>
module attributes {stable_mosaic.version = 11 : i64} {
  func.func @_nbeats_resident_kernel(%arg0: memref<2x8xf32, #tpu.memory_space<vmem>>, %arg1: memref<6x8x32xbf16, #tpu.memory_space<vmem>>, %arg2: memref<6x32x32xbf16, #tpu.memory_space<vmem>>, %arg3: memref<6x32x16xbf16, #tpu.memory_space<vmem>>, %arg4: memref<6x8x8xbf16, #tpu.memory_space<vmem>>, %arg5: memref<6x8x8xbf16, #tpu.memory_space<vmem>>, %arg6: memref<6x5x32xf32, #tpu.memory_space<vmem>>, %arg7: memref<2x8xf32, #tpu.memory_space<vmem>>) attributes {dimension_semantics = [], scalar_prefetch = 0 : i64, scratch_operands = 0 : i64, tpu.core_type = #tpu.core_type<tc>} {
    %c0 = arith.constant 0 : index
    %c0_0 = arith.constant 0 : index
    %0 = vector.load %arg0[%c0, %c0_0] : memref<2x8xf32, #tpu.memory_space<vmem>>, vector<2x8xf32>
    %cst = arith.constant 0.000000e+00 : f32
    %1 = vector.broadcast %cst : f32 to vector<2x8xf32>
    %c0_1 = arith.constant 0 : index
    %c0_2 = arith.constant 0 : index
    %c0_3 = arith.constant 0 : index
    %2 = vector.load %arg6[%c0_1, %c0_2, %c0_3] : memref<6x5x32xf32, #tpu.memory_space<vmem>>, vector<1x5x32xf32>
    %3 = vector.shape_cast %2 : vector<1x5x32xf32> to vector<5x32xf32>
    %4 = arith.truncf %0 : vector<2x8xf32> to vector<2x8xbf16>
    %c0_4 = arith.constant 0 : index
    %c0_5 = arith.constant 0 : index
    %c0_6 = arith.constant 0 : index
    %5 = vector.load %arg1[%c0_4, %c0_5, %c0_6] : memref<6x8x32xbf16, #tpu.memory_space<vmem>>, vector<1x8x32xbf16>
    %6 = vector.shape_cast %5 : vector<1x8x32xbf16> to vector<8x32xbf16>
    %cst_7 = arith.constant dense<0.000000e+00> : vector<2x32xf32>
    %7 = tpu.matmul %4, %6, %cst_7 {dimension_numbers = #tpu.dot_dimension_numbers<[1], [0], [0], [1], [0, 0, 1, 1], [], []>} : vector<2x8xbf16>, vector<8x32xbf16>, vector<2x32xf32> -> vector<2x32xf32>
    %8 = vector.extract_strided_slice %3 {offsets = [0, 0], sizes = [1, 32], strides = [1, 1]} : vector<5x32xf32> to vector<1x32xf32>
    %9 = vector.broadcast %8 : vector<1x32xf32> to vector<2x32xf32>
    %10 = arith.addf %7, %9 : vector<2x32xf32>
    %cst_8 = arith.constant 0.000000e+00 : f32
    %11 = vector.broadcast %cst_8 : f32 to vector<2x32xf32>
    %12 = arith.maximumf %10, %11 : vector<2x32xf32>
    %13 = arith.truncf %12 : vector<2x32xf32> to vector<2x32xbf16>
    %c0_9 = arith.constant 0 : index
    %c0_10 = arith.constant 0 : index
    %c0_11 = arith.constant 0 : index
    %14 = vector.load %arg2[%c0_9, %c0_10, %c0_11] : memref<6x32x32xbf16, #tpu.memory_space<vmem>>, vector<1x32x32xbf16>
    %15 = vector.shape_cast %14 : vector<1x32x32xbf16> to vector<32x32xbf16>
    %cst_12 = arith.constant dense<0.000000e+00> : vector<2x32xf32>
    %16 = tpu.matmul %13, %15, %cst_12 {dimension_numbers = #tpu.dot_dimension_numbers<[1], [0], [0], [1], [0, 0, 1, 1], [], []>} : vector<2x32xbf16>, vector<32x32xbf16>, vector<2x32xf32> -> vector<2x32xf32>
    %17 = vector.extract_strided_slice %3 {offsets = [1, 0], sizes = [1, 32], strides = [1, 1]} : vector<5x32xf32> to vector<1x32xf32>
    %18 = vector.broadcast %17 : vector<1x32xf32> to vector<2x32xf32>
    %19 = arith.addf %16, %18 : vector<2x32xf32>
    %cst_13 = arith.constant 0.000000e+00 : f32
    %20 = vector.broadcast %cst_13 : f32 to vector<2x32xf32>
    %21 = arith.maximumf %19, %20 : vector<2x32xf32>
    %22 = arith.truncf %21 : vector<2x32xf32> to vector<2x32xbf16>
    %c0_14 = arith.constant 0 : index
    %c0_15 = arith.constant 0 : index
    %c0_16 = arith.constant 0 : index
    %23 = vector.load %arg3[%c0_14, %c0_15, %c0_16] : memref<6x32x16xbf16, #tpu.memory_space<vmem>>, vector<1x32x16xbf16>
    %24 = vector.shape_cast %23 : vector<1x32x16xbf16> to vector<32x16xbf16>
    %cst_17 = arith.constant dense<0.000000e+00> : vector<2x16xf32>
    %25 = tpu.matmul %22, %24, %cst_17 {dimension_numbers = #tpu.dot_dimension_numbers<[1], [0], [0], [1], [0, 0, 1, 1], [], []>} : vector<2x32xbf16>, vector<32x16xbf16>, vector<2x16xf32> -> vector<2x16xf32>
    %26 = vector.extract_strided_slice %3 {offsets = [2, 0], sizes = [1, 16], strides = [1, 1]} : vector<5x32xf32> to vector<1x16xf32>
    %27 = vector.broadcast %26 : vector<1x16xf32> to vector<2x16xf32>
    %28 = arith.addf %25, %27 : vector<2x16xf32>
    %29 = vector.extract_strided_slice %28 {offsets = [0, 0], sizes = [2, 8], strides = [1, 1]} : vector<2x16xf32> to vector<2x8xf32>
    %30 = arith.truncf %29 : vector<2x8xf32> to vector<2x8xbf16>
    %31 = vector.extract_strided_slice %28 {offsets = [0, 8], sizes = [2, 8], strides = [1, 1]} : vector<2x16xf32> to vector<2x8xf32>
    %32 = arith.truncf %31 : vector<2x8xf32> to vector<2x8xbf16>
    %c0_18 = arith.constant 0 : index
    %c0_19 = arith.constant 0 : index
    %c0_20 = arith.constant 0 : index
    %33 = vector.load %arg4[%c0_18, %c0_19, %c0_20] : memref<6x8x8xbf16, #tpu.memory_space<vmem>>, vector<1x8x8xbf16>
    %34 = vector.shape_cast %33 : vector<1x8x8xbf16> to vector<8x8xbf16>
    %cst_21 = arith.constant dense<0.000000e+00> : vector<2x8xf32>
    %35 = tpu.matmul %30, %34, %cst_21 {dimension_numbers = #tpu.dot_dimension_numbers<[1], [0], [0], [1], [0, 0, 1, 1], [], []>} : vector<2x8xbf16>, vector<8x8xbf16>, vector<2x8xf32> -> vector<2x8xf32>
    %36 = vector.extract_strided_slice %3 {offsets = [3, 0], sizes = [1, 8], strides = [1, 1]} : vector<5x32xf32> to vector<1x8xf32>
    %37 = vector.broadcast %36 : vector<1x8xf32> to vector<2x8xf32>
    %38 = arith.addf %35, %37 : vector<2x8xf32>
    %39 = arith.subf %0, %38 : vector<2x8xf32>
    %c0_22 = arith.constant 0 : index
    %c0_23 = arith.constant 0 : index
    %c0_24 = arith.constant 0 : index
    %40 = vector.load %arg5[%c0_22, %c0_23, %c0_24] : memref<6x8x8xbf16, #tpu.memory_space<vmem>>, vector<1x8x8xbf16>
    %41 = vector.shape_cast %40 : vector<1x8x8xbf16> to vector<8x8xbf16>
    %cst_25 = arith.constant dense<0.000000e+00> : vector<2x8xf32>
    %42 = tpu.matmul %32, %41, %cst_25 {dimension_numbers = #tpu.dot_dimension_numbers<[1], [0], [0], [1], [0, 0, 1, 1], [], []>} : vector<2x8xbf16>, vector<8x8xbf16>, vector<2x8xf32> -> vector<2x8xf32>
    %43 = vector.extract_strided_slice %3 {offsets = [4, 0], sizes = [1, 8], strides = [1, 1]} : vector<5x32xf32> to vector<1x8xf32>
    %44 = vector.broadcast %43 : vector<1x8xf32> to vector<2x8xf32>
    %45 = arith.addf %42, %44 : vector<2x8xf32>
    %46 = arith.addf %1, %45 : vector<2x8xf32>
    %c1 = arith.constant 1 : index
    %c0_26 = arith.constant 0 : index
    %c0_27 = arith.constant 0 : index
    %47 = vector.load %arg6[%c1, %c0_26, %c0_27] : memref<6x5x32xf32, #tpu.memory_space<vmem>>, vector<1x5x32xf32>
    %48 = vector.shape_cast %47 : vector<1x5x32xf32> to vector<5x32xf32>
    %49 = arith.truncf %39 : vector<2x8xf32> to vector<2x8xbf16>
    %c1_28 = arith.constant 1 : index
    %c0_29 = arith.constant 0 : index
    %c0_30 = arith.constant 0 : index
    %50 = vector.load %arg1[%c1_28, %c0_29, %c0_30] : memref<6x8x32xbf16, #tpu.memory_space<vmem>>, vector<1x8x32xbf16>
    %51 = vector.shape_cast %50 : vector<1x8x32xbf16> to vector<8x32xbf16>
    %cst_31 = arith.constant dense<0.000000e+00> : vector<2x32xf32>
    %52 = tpu.matmul %49, %51, %cst_31 {dimension_numbers = #tpu.dot_dimension_numbers<[1], [0], [0], [1], [0, 0, 1, 1], [], []>} : vector<2x8xbf16>, vector<8x32xbf16>, vector<2x32xf32> -> vector<2x32xf32>
    %53 = vector.extract_strided_slice %48 {offsets = [0, 0], sizes = [1, 32], strides = [1, 1]} : vector<5x32xf32> to vector<1x32xf32>
    %54 = vector.broadcast %53 : vector<1x32xf32> to vector<2x32xf32>
    %55 = arith.addf %52, %54 : vector<2x32xf32>
    %cst_32 = arith.constant 0.000000e+00 : f32
    %56 = vector.broadcast %cst_32 : f32 to vector<2x32xf32>
    %57 = arith.maximumf %55, %56 : vector<2x32xf32>
    %58 = arith.truncf %57 : vector<2x32xf32> to vector<2x32xbf16>
    %c1_33 = arith.constant 1 : index
    %c0_34 = arith.constant 0 : index
    %c0_35 = arith.constant 0 : index
    %59 = vector.load %arg2[%c1_33, %c0_34, %c0_35] : memref<6x32x32xbf16, #tpu.memory_space<vmem>>, vector<1x32x32xbf16>
    %60 = vector.shape_cast %59 : vector<1x32x32xbf16> to vector<32x32xbf16>
    %cst_36 = arith.constant dense<0.000000e+00> : vector<2x32xf32>
    %61 = tpu.matmul %58, %60, %cst_36 {dimension_numbers = #tpu.dot_dimension_numbers<[1], [0], [0], [1], [0, 0, 1, 1], [], []>} : vector<2x32xbf16>, vector<32x32xbf16>, vector<2x32xf32> -> vector<2x32xf32>
    %62 = vector.extract_strided_slice %48 {offsets = [1, 0], sizes = [1, 32], strides = [1, 1]} : vector<5x32xf32> to vector<1x32xf32>
    %63 = vector.broadcast %62 : vector<1x32xf32> to vector<2x32xf32>
    %64 = arith.addf %61, %63 : vector<2x32xf32>
    %cst_37 = arith.constant 0.000000e+00 : f32
    %65 = vector.broadcast %cst_37 : f32 to vector<2x32xf32>
    %66 = arith.maximumf %64, %65 : vector<2x32xf32>
    %67 = arith.truncf %66 : vector<2x32xf32> to vector<2x32xbf16>
    %c1_38 = arith.constant 1 : index
    %c0_39 = arith.constant 0 : index
    %c0_40 = arith.constant 0 : index
    %68 = vector.load %arg3[%c1_38, %c0_39, %c0_40] : memref<6x32x16xbf16, #tpu.memory_space<vmem>>, vector<1x32x16xbf16>
    %69 = vector.shape_cast %68 : vector<1x32x16xbf16> to vector<32x16xbf16>
    %cst_41 = arith.constant dense<0.000000e+00> : vector<2x16xf32>
    %70 = tpu.matmul %67, %69, %cst_41 {dimension_numbers = #tpu.dot_dimension_numbers<[1], [0], [0], [1], [0, 0, 1, 1], [], []>} : vector<2x32xbf16>, vector<32x16xbf16>, vector<2x16xf32> -> vector<2x16xf32>
    %71 = vector.extract_strided_slice %48 {offsets = [2, 0], sizes = [1, 16], strides = [1, 1]} : vector<5x32xf32> to vector<1x16xf32>
    %72 = vector.broadcast %71 : vector<1x16xf32> to vector<2x16xf32>
    %73 = arith.addf %70, %72 : vector<2x16xf32>
    %74 = vector.extract_strided_slice %73 {offsets = [0, 0], sizes = [2, 8], strides = [1, 1]} : vector<2x16xf32> to vector<2x8xf32>
    %75 = arith.truncf %74 : vector<2x8xf32> to vector<2x8xbf16>
    %76 = vector.extract_strided_slice %73 {offsets = [0, 8], sizes = [2, 8], strides = [1, 1]} : vector<2x16xf32> to vector<2x8xf32>
    %77 = arith.truncf %76 : vector<2x8xf32> to vector<2x8xbf16>
    %c1_42 = arith.constant 1 : index
    %c0_43 = arith.constant 0 : index
    %c0_44 = arith.constant 0 : index
    %78 = vector.load %arg4[%c1_42, %c0_43, %c0_44] : memref<6x8x8xbf16, #tpu.memory_space<vmem>>, vector<1x8x8xbf16>
    %79 = vector.shape_cast %78 : vector<1x8x8xbf16> to vector<8x8xbf16>
    %cst_45 = arith.constant dense<0.000000e+00> : vector<2x8xf32>
    %80 = tpu.matmul %75, %79, %cst_45 {dimension_numbers = #tpu.dot_dimension_numbers<[1], [0], [0], [1], [0, 0, 1, 1], [], []>} : vector<2x8xbf16>, vector<8x8xbf16>, vector<2x8xf32> -> vector<2x8xf32>
    %81 = vector.extract_strided_slice %48 {offsets = [3, 0], sizes = [1, 8], strides = [1, 1]} : vector<5x32xf32> to vector<1x8xf32>
    %82 = vector.broadcast %81 : vector<1x8xf32> to vector<2x8xf32>
    %83 = arith.addf %80, %82 : vector<2x8xf32>
    %84 = arith.subf %39, %83 : vector<2x8xf32>
    %c1_46 = arith.constant 1 : index
    %c0_47 = arith.constant 0 : index
    %c0_48 = arith.constant 0 : index
    %85 = vector.load %arg5[%c1_46, %c0_47, %c0_48] : memref<6x8x8xbf16, #tpu.memory_space<vmem>>, vector<1x8x8xbf16>
    %86 = vector.shape_cast %85 : vector<1x8x8xbf16> to vector<8x8xbf16>
    %cst_49 = arith.constant dense<0.000000e+00> : vector<2x8xf32>
    %87 = tpu.matmul %77, %86, %cst_49 {dimension_numbers = #tpu.dot_dimension_numbers<[1], [0], [0], [1], [0, 0, 1, 1], [], []>} : vector<2x8xbf16>, vector<8x8xbf16>, vector<2x8xf32> -> vector<2x8xf32>
    %88 = vector.extract_strided_slice %48 {offsets = [4, 0], sizes = [1, 8], strides = [1, 1]} : vector<5x32xf32> to vector<1x8xf32>
    %89 = vector.broadcast %88 : vector<1x8xf32> to vector<2x8xf32>
    %90 = arith.addf %87, %89 : vector<2x8xf32>
    %91 = arith.addf %46, %90 : vector<2x8xf32>
    %c2 = arith.constant 2 : index
    %c0_50 = arith.constant 0 : index
    %c0_51 = arith.constant 0 : index
    %92 = vector.load %arg6[%c2, %c0_50, %c0_51] : memref<6x5x32xf32, #tpu.memory_space<vmem>>, vector<1x5x32xf32>
    %93 = vector.shape_cast %92 : vector<1x5x32xf32> to vector<5x32xf32>
    %94 = arith.truncf %84 : vector<2x8xf32> to vector<2x8xbf16>
    %c2_52 = arith.constant 2 : index
    %c0_53 = arith.constant 0 : index
    %c0_54 = arith.constant 0 : index
    %95 = vector.load %arg1[%c2_52, %c0_53, %c0_54] : memref<6x8x32xbf16, #tpu.memory_space<vmem>>, vector<1x8x32xbf16>
    %96 = vector.shape_cast %95 : vector<1x8x32xbf16> to vector<8x32xbf16>
    %cst_55 = arith.constant dense<0.000000e+00> : vector<2x32xf32>
    %97 = tpu.matmul %94, %96, %cst_55 {dimension_numbers = #tpu.dot_dimension_numbers<[1], [0], [0], [1], [0, 0, 1, 1], [], []>} : vector<2x8xbf16>, vector<8x32xbf16>, vector<2x32xf32> -> vector<2x32xf32>
    %98 = vector.extract_strided_slice %93 {offsets = [0, 0], sizes = [1, 32], strides = [1, 1]} : vector<5x32xf32> to vector<1x32xf32>
    %99 = vector.broadcast %98 : vector<1x32xf32> to vector<2x32xf32>
    %100 = arith.addf %97, %99 : vector<2x32xf32>
    %cst_56 = arith.constant 0.000000e+00 : f32
    %101 = vector.broadcast %cst_56 : f32 to vector<2x32xf32>
    %102 = arith.maximumf %100, %101 : vector<2x32xf32>
    %103 = arith.truncf %102 : vector<2x32xf32> to vector<2x32xbf16>
    %c2_57 = arith.constant 2 : index
    %c0_58 = arith.constant 0 : index
    %c0_59 = arith.constant 0 : index
    %104 = vector.load %arg2[%c2_57, %c0_58, %c0_59] : memref<6x32x32xbf16, #tpu.memory_space<vmem>>, vector<1x32x32xbf16>
    %105 = vector.shape_cast %104 : vector<1x32x32xbf16> to vector<32x32xbf16>
    %cst_60 = arith.constant dense<0.000000e+00> : vector<2x32xf32>
    %106 = tpu.matmul %103, %105, %cst_60 {dimension_numbers = #tpu.dot_dimension_numbers<[1], [0], [0], [1], [0, 0, 1, 1], [], []>} : vector<2x32xbf16>, vector<32x32xbf16>, vector<2x32xf32> -> vector<2x32xf32>
    %107 = vector.extract_strided_slice %93 {offsets = [1, 0], sizes = [1, 32], strides = [1, 1]} : vector<5x32xf32> to vector<1x32xf32>
    %108 = vector.broadcast %107 : vector<1x32xf32> to vector<2x32xf32>
    %109 = arith.addf %106, %108 : vector<2x32xf32>
    %cst_61 = arith.constant 0.000000e+00 : f32
    %110 = vector.broadcast %cst_61 : f32 to vector<2x32xf32>
    %111 = arith.maximumf %109, %110 : vector<2x32xf32>
    %112 = arith.truncf %111 : vector<2x32xf32> to vector<2x32xbf16>
    %c2_62 = arith.constant 2 : index
    %c0_63 = arith.constant 0 : index
    %c0_64 = arith.constant 0 : index
    %113 = vector.load %arg3[%c2_62, %c0_63, %c0_64] : memref<6x32x16xbf16, #tpu.memory_space<vmem>>, vector<1x32x16xbf16>
    %114 = vector.shape_cast %113 : vector<1x32x16xbf16> to vector<32x16xbf16>
    %cst_65 = arith.constant dense<0.000000e+00> : vector<2x16xf32>
    %115 = tpu.matmul %112, %114, %cst_65 {dimension_numbers = #tpu.dot_dimension_numbers<[1], [0], [0], [1], [0, 0, 1, 1], [], []>} : vector<2x32xbf16>, vector<32x16xbf16>, vector<2x16xf32> -> vector<2x16xf32>
    %116 = vector.extract_strided_slice %93 {offsets = [2, 0], sizes = [1, 16], strides = [1, 1]} : vector<5x32xf32> to vector<1x16xf32>
    %117 = vector.broadcast %116 : vector<1x16xf32> to vector<2x16xf32>
    %118 = arith.addf %115, %117 : vector<2x16xf32>
    %119 = vector.extract_strided_slice %118 {offsets = [0, 0], sizes = [2, 8], strides = [1, 1]} : vector<2x16xf32> to vector<2x8xf32>
    %120 = arith.truncf %119 : vector<2x8xf32> to vector<2x8xbf16>
    %121 = vector.extract_strided_slice %118 {offsets = [0, 8], sizes = [2, 8], strides = [1, 1]} : vector<2x16xf32> to vector<2x8xf32>
    %122 = arith.truncf %121 : vector<2x8xf32> to vector<2x8xbf16>
    %c2_66 = arith.constant 2 : index
    %c0_67 = arith.constant 0 : index
    %c0_68 = arith.constant 0 : index
    %123 = vector.load %arg4[%c2_66, %c0_67, %c0_68] : memref<6x8x8xbf16, #tpu.memory_space<vmem>>, vector<1x8x8xbf16>
    %124 = vector.shape_cast %123 : vector<1x8x8xbf16> to vector<8x8xbf16>
    %cst_69 = arith.constant dense<0.000000e+00> : vector<2x8xf32>
    %125 = tpu.matmul %120, %124, %cst_69 {dimension_numbers = #tpu.dot_dimension_numbers<[1], [0], [0], [1], [0, 0, 1, 1], [], []>} : vector<2x8xbf16>, vector<8x8xbf16>, vector<2x8xf32> -> vector<2x8xf32>
    %126 = vector.extract_strided_slice %93 {offsets = [3, 0], sizes = [1, 8], strides = [1, 1]} : vector<5x32xf32> to vector<1x8xf32>
    %127 = vector.broadcast %126 : vector<1x8xf32> to vector<2x8xf32>
    %128 = arith.addf %125, %127 : vector<2x8xf32>
    %129 = arith.subf %84, %128 : vector<2x8xf32>
    %c2_70 = arith.constant 2 : index
    %c0_71 = arith.constant 0 : index
    %c0_72 = arith.constant 0 : index
    %130 = vector.load %arg5[%c2_70, %c0_71, %c0_72] : memref<6x8x8xbf16, #tpu.memory_space<vmem>>, vector<1x8x8xbf16>
    %131 = vector.shape_cast %130 : vector<1x8x8xbf16> to vector<8x8xbf16>
    %cst_73 = arith.constant dense<0.000000e+00> : vector<2x8xf32>
    %132 = tpu.matmul %122, %131, %cst_73 {dimension_numbers = #tpu.dot_dimension_numbers<[1], [0], [0], [1], [0, 0, 1, 1], [], []>} : vector<2x8xbf16>, vector<8x8xbf16>, vector<2x8xf32> -> vector<2x8xf32>
    %133 = vector.extract_strided_slice %93 {offsets = [4, 0], sizes = [1, 8], strides = [1, 1]} : vector<5x32xf32> to vector<1x8xf32>
    %134 = vector.broadcast %133 : vector<1x8xf32> to vector<2x8xf32>
    %135 = arith.addf %132, %134 : vector<2x8xf32>
    %136 = arith.addf %91, %135 : vector<2x8xf32>
    %c3 = arith.constant 3 : index
    %c0_74 = arith.constant 0 : index
    %c0_75 = arith.constant 0 : index
    %137 = vector.load %arg6[%c3, %c0_74, %c0_75] : memref<6x5x32xf32, #tpu.memory_space<vmem>>, vector<1x5x32xf32>
    %138 = vector.shape_cast %137 : vector<1x5x32xf32> to vector<5x32xf32>
    %139 = arith.truncf %129 : vector<2x8xf32> to vector<2x8xbf16>
    %c3_76 = arith.constant 3 : index
    %c0_77 = arith.constant 0 : index
    %c0_78 = arith.constant 0 : index
    %140 = vector.load %arg1[%c3_76, %c0_77, %c0_78] : memref<6x8x32xbf16, #tpu.memory_space<vmem>>, vector<1x8x32xbf16>
    %141 = vector.shape_cast %140 : vector<1x8x32xbf16> to vector<8x32xbf16>
    %cst_79 = arith.constant dense<0.000000e+00> : vector<2x32xf32>
    %142 = tpu.matmul %139, %141, %cst_79 {dimension_numbers = #tpu.dot_dimension_numbers<[1], [0], [0], [1], [0, 0, 1, 1], [], []>} : vector<2x8xbf16>, vector<8x32xbf16>, vector<2x32xf32> -> vector<2x32xf32>
    %143 = vector.extract_strided_slice %138 {offsets = [0, 0], sizes = [1, 32], strides = [1, 1]} : vector<5x32xf32> to vector<1x32xf32>
    %144 = vector.broadcast %143 : vector<1x32xf32> to vector<2x32xf32>
    %145 = arith.addf %142, %144 : vector<2x32xf32>
    %cst_80 = arith.constant 0.000000e+00 : f32
    %146 = vector.broadcast %cst_80 : f32 to vector<2x32xf32>
    %147 = arith.maximumf %145, %146 : vector<2x32xf32>
    %148 = arith.truncf %147 : vector<2x32xf32> to vector<2x32xbf16>
    %c3_81 = arith.constant 3 : index
    %c0_82 = arith.constant 0 : index
    %c0_83 = arith.constant 0 : index
    %149 = vector.load %arg2[%c3_81, %c0_82, %c0_83] : memref<6x32x32xbf16, #tpu.memory_space<vmem>>, vector<1x32x32xbf16>
    %150 = vector.shape_cast %149 : vector<1x32x32xbf16> to vector<32x32xbf16>
    %cst_84 = arith.constant dense<0.000000e+00> : vector<2x32xf32>
    %151 = tpu.matmul %148, %150, %cst_84 {dimension_numbers = #tpu.dot_dimension_numbers<[1], [0], [0], [1], [0, 0, 1, 1], [], []>} : vector<2x32xbf16>, vector<32x32xbf16>, vector<2x32xf32> -> vector<2x32xf32>
    %152 = vector.extract_strided_slice %138 {offsets = [1, 0], sizes = [1, 32], strides = [1, 1]} : vector<5x32xf32> to vector<1x32xf32>
    %153 = vector.broadcast %152 : vector<1x32xf32> to vector<2x32xf32>
    %154 = arith.addf %151, %153 : vector<2x32xf32>
    %cst_85 = arith.constant 0.000000e+00 : f32
    %155 = vector.broadcast %cst_85 : f32 to vector<2x32xf32>
    %156 = arith.maximumf %154, %155 : vector<2x32xf32>
    %157 = arith.truncf %156 : vector<2x32xf32> to vector<2x32xbf16>
    %c3_86 = arith.constant 3 : index
    %c0_87 = arith.constant 0 : index
    %c0_88 = arith.constant 0 : index
    %158 = vector.load %arg3[%c3_86, %c0_87, %c0_88] : memref<6x32x16xbf16, #tpu.memory_space<vmem>>, vector<1x32x16xbf16>
    %159 = vector.shape_cast %158 : vector<1x32x16xbf16> to vector<32x16xbf16>
    %cst_89 = arith.constant dense<0.000000e+00> : vector<2x16xf32>
    %160 = tpu.matmul %157, %159, %cst_89 {dimension_numbers = #tpu.dot_dimension_numbers<[1], [0], [0], [1], [0, 0, 1, 1], [], []>} : vector<2x32xbf16>, vector<32x16xbf16>, vector<2x16xf32> -> vector<2x16xf32>
    %161 = vector.extract_strided_slice %138 {offsets = [2, 0], sizes = [1, 16], strides = [1, 1]} : vector<5x32xf32> to vector<1x16xf32>
    %162 = vector.broadcast %161 : vector<1x16xf32> to vector<2x16xf32>
    %163 = arith.addf %160, %162 : vector<2x16xf32>
    %164 = vector.extract_strided_slice %163 {offsets = [0, 0], sizes = [2, 8], strides = [1, 1]} : vector<2x16xf32> to vector<2x8xf32>
    %165 = arith.truncf %164 : vector<2x8xf32> to vector<2x8xbf16>
    %166 = vector.extract_strided_slice %163 {offsets = [0, 8], sizes = [2, 8], strides = [1, 1]} : vector<2x16xf32> to vector<2x8xf32>
    %167 = arith.truncf %166 : vector<2x8xf32> to vector<2x8xbf16>
    %c3_90 = arith.constant 3 : index
    %c0_91 = arith.constant 0 : index
    %c0_92 = arith.constant 0 : index
    %168 = vector.load %arg4[%c3_90, %c0_91, %c0_92] : memref<6x8x8xbf16, #tpu.memory_space<vmem>>, vector<1x8x8xbf16>
    %169 = vector.shape_cast %168 : vector<1x8x8xbf16> to vector<8x8xbf16>
    %cst_93 = arith.constant dense<0.000000e+00> : vector<2x8xf32>
    %170 = tpu.matmul %165, %169, %cst_93 {dimension_numbers = #tpu.dot_dimension_numbers<[1], [0], [0], [1], [0, 0, 1, 1], [], []>} : vector<2x8xbf16>, vector<8x8xbf16>, vector<2x8xf32> -> vector<2x8xf32>
    %171 = vector.extract_strided_slice %138 {offsets = [3, 0], sizes = [1, 8], strides = [1, 1]} : vector<5x32xf32> to vector<1x8xf32>
    %172 = vector.broadcast %171 : vector<1x8xf32> to vector<2x8xf32>
    %173 = arith.addf %170, %172 : vector<2x8xf32>
    %174 = arith.subf %129, %173 : vector<2x8xf32>
    %c3_94 = arith.constant 3 : index
    %c0_95 = arith.constant 0 : index
    %c0_96 = arith.constant 0 : index
    %175 = vector.load %arg5[%c3_94, %c0_95, %c0_96] : memref<6x8x8xbf16, #tpu.memory_space<vmem>>, vector<1x8x8xbf16>
    %176 = vector.shape_cast %175 : vector<1x8x8xbf16> to vector<8x8xbf16>
    %cst_97 = arith.constant dense<0.000000e+00> : vector<2x8xf32>
    %177 = tpu.matmul %167, %176, %cst_97 {dimension_numbers = #tpu.dot_dimension_numbers<[1], [0], [0], [1], [0, 0, 1, 1], [], []>} : vector<2x8xbf16>, vector<8x8xbf16>, vector<2x8xf32> -> vector<2x8xf32>
    %178 = vector.extract_strided_slice %138 {offsets = [4, 0], sizes = [1, 8], strides = [1, 1]} : vector<5x32xf32> to vector<1x8xf32>
    %179 = vector.broadcast %178 : vector<1x8xf32> to vector<2x8xf32>
    %180 = arith.addf %177, %179 : vector<2x8xf32>
    %181 = arith.addf %136, %180 : vector<2x8xf32>
    %c4 = arith.constant 4 : index
    %c0_98 = arith.constant 0 : index
    %c0_99 = arith.constant 0 : index
    %182 = vector.load %arg6[%c4, %c0_98, %c0_99] : memref<6x5x32xf32, #tpu.memory_space<vmem>>, vector<1x5x32xf32>
    %183 = vector.shape_cast %182 : vector<1x5x32xf32> to vector<5x32xf32>
    %184 = arith.truncf %174 : vector<2x8xf32> to vector<2x8xbf16>
    %c4_100 = arith.constant 4 : index
    %c0_101 = arith.constant 0 : index
    %c0_102 = arith.constant 0 : index
    %185 = vector.load %arg1[%c4_100, %c0_101, %c0_102] : memref<6x8x32xbf16, #tpu.memory_space<vmem>>, vector<1x8x32xbf16>
    %186 = vector.shape_cast %185 : vector<1x8x32xbf16> to vector<8x32xbf16>
    %cst_103 = arith.constant dense<0.000000e+00> : vector<2x32xf32>
    %187 = tpu.matmul %184, %186, %cst_103 {dimension_numbers = #tpu.dot_dimension_numbers<[1], [0], [0], [1], [0, 0, 1, 1], [], []>} : vector<2x8xbf16>, vector<8x32xbf16>, vector<2x32xf32> -> vector<2x32xf32>
    %188 = vector.extract_strided_slice %183 {offsets = [0, 0], sizes = [1, 32], strides = [1, 1]} : vector<5x32xf32> to vector<1x32xf32>
    %189 = vector.broadcast %188 : vector<1x32xf32> to vector<2x32xf32>
    %190 = arith.addf %187, %189 : vector<2x32xf32>
    %cst_104 = arith.constant 0.000000e+00 : f32
    %191 = vector.broadcast %cst_104 : f32 to vector<2x32xf32>
    %192 = arith.maximumf %190, %191 : vector<2x32xf32>
    %193 = arith.truncf %192 : vector<2x32xf32> to vector<2x32xbf16>
    %c4_105 = arith.constant 4 : index
    %c0_106 = arith.constant 0 : index
    %c0_107 = arith.constant 0 : index
    %194 = vector.load %arg2[%c4_105, %c0_106, %c0_107] : memref<6x32x32xbf16, #tpu.memory_space<vmem>>, vector<1x32x32xbf16>
    %195 = vector.shape_cast %194 : vector<1x32x32xbf16> to vector<32x32xbf16>
    %cst_108 = arith.constant dense<0.000000e+00> : vector<2x32xf32>
    %196 = tpu.matmul %193, %195, %cst_108 {dimension_numbers = #tpu.dot_dimension_numbers<[1], [0], [0], [1], [0, 0, 1, 1], [], []>} : vector<2x32xbf16>, vector<32x32xbf16>, vector<2x32xf32> -> vector<2x32xf32>
    %197 = vector.extract_strided_slice %183 {offsets = [1, 0], sizes = [1, 32], strides = [1, 1]} : vector<5x32xf32> to vector<1x32xf32>
    %198 = vector.broadcast %197 : vector<1x32xf32> to vector<2x32xf32>
    %199 = arith.addf %196, %198 : vector<2x32xf32>
    %cst_109 = arith.constant 0.000000e+00 : f32
    %200 = vector.broadcast %cst_109 : f32 to vector<2x32xf32>
    %201 = arith.maximumf %199, %200 : vector<2x32xf32>
    %202 = arith.truncf %201 : vector<2x32xf32> to vector<2x32xbf16>
    %c4_110 = arith.constant 4 : index
    %c0_111 = arith.constant 0 : index
    %c0_112 = arith.constant 0 : index
    %203 = vector.load %arg3[%c4_110, %c0_111, %c0_112] : memref<6x32x16xbf16, #tpu.memory_space<vmem>>, vector<1x32x16xbf16>
    %204 = vector.shape_cast %203 : vector<1x32x16xbf16> to vector<32x16xbf16>
    %cst_113 = arith.constant dense<0.000000e+00> : vector<2x16xf32>
    %205 = tpu.matmul %202, %204, %cst_113 {dimension_numbers = #tpu.dot_dimension_numbers<[1], [0], [0], [1], [0, 0, 1, 1], [], []>} : vector<2x32xbf16>, vector<32x16xbf16>, vector<2x16xf32> -> vector<2x16xf32>
    %206 = vector.extract_strided_slice %183 {offsets = [2, 0], sizes = [1, 16], strides = [1, 1]} : vector<5x32xf32> to vector<1x16xf32>
    %207 = vector.broadcast %206 : vector<1x16xf32> to vector<2x16xf32>
    %208 = arith.addf %205, %207 : vector<2x16xf32>
    %209 = vector.extract_strided_slice %208 {offsets = [0, 0], sizes = [2, 8], strides = [1, 1]} : vector<2x16xf32> to vector<2x8xf32>
    %210 = arith.truncf %209 : vector<2x8xf32> to vector<2x8xbf16>
    %211 = vector.extract_strided_slice %208 {offsets = [0, 8], sizes = [2, 8], strides = [1, 1]} : vector<2x16xf32> to vector<2x8xf32>
    %212 = arith.truncf %211 : vector<2x8xf32> to vector<2x8xbf16>
    %c4_114 = arith.constant 4 : index
    %c0_115 = arith.constant 0 : index
    %c0_116 = arith.constant 0 : index
    %213 = vector.load %arg4[%c4_114, %c0_115, %c0_116] : memref<6x8x8xbf16, #tpu.memory_space<vmem>>, vector<1x8x8xbf16>
    %214 = vector.shape_cast %213 : vector<1x8x8xbf16> to vector<8x8xbf16>
    %cst_117 = arith.constant dense<0.000000e+00> : vector<2x8xf32>
    %215 = tpu.matmul %210, %214, %cst_117 {dimension_numbers = #tpu.dot_dimension_numbers<[1], [0], [0], [1], [0, 0, 1, 1], [], []>} : vector<2x8xbf16>, vector<8x8xbf16>, vector<2x8xf32> -> vector<2x8xf32>
    %216 = vector.extract_strided_slice %183 {offsets = [3, 0], sizes = [1, 8], strides = [1, 1]} : vector<5x32xf32> to vector<1x8xf32>
    %217 = vector.broadcast %216 : vector<1x8xf32> to vector<2x8xf32>
    %218 = arith.addf %215, %217 : vector<2x8xf32>
    %219 = arith.subf %174, %218 : vector<2x8xf32>
    %c4_118 = arith.constant 4 : index
    %c0_119 = arith.constant 0 : index
    %c0_120 = arith.constant 0 : index
    %220 = vector.load %arg5[%c4_118, %c0_119, %c0_120] : memref<6x8x8xbf16, #tpu.memory_space<vmem>>, vector<1x8x8xbf16>
    %221 = vector.shape_cast %220 : vector<1x8x8xbf16> to vector<8x8xbf16>
    %cst_121 = arith.constant dense<0.000000e+00> : vector<2x8xf32>
    %222 = tpu.matmul %212, %221, %cst_121 {dimension_numbers = #tpu.dot_dimension_numbers<[1], [0], [0], [1], [0, 0, 1, 1], [], []>} : vector<2x8xbf16>, vector<8x8xbf16>, vector<2x8xf32> -> vector<2x8xf32>
    %223 = vector.extract_strided_slice %183 {offsets = [4, 0], sizes = [1, 8], strides = [1, 1]} : vector<5x32xf32> to vector<1x8xf32>
    %224 = vector.broadcast %223 : vector<1x8xf32> to vector<2x8xf32>
    %225 = arith.addf %222, %224 : vector<2x8xf32>
    %226 = arith.addf %181, %225 : vector<2x8xf32>
    %c5 = arith.constant 5 : index
    %c0_122 = arith.constant 0 : index
    %c0_123 = arith.constant 0 : index
    %227 = vector.load %arg6[%c5, %c0_122, %c0_123] : memref<6x5x32xf32, #tpu.memory_space<vmem>>, vector<1x5x32xf32>
    %228 = vector.shape_cast %227 : vector<1x5x32xf32> to vector<5x32xf32>
    %229 = arith.truncf %219 : vector<2x8xf32> to vector<2x8xbf16>
    %c5_124 = arith.constant 5 : index
    %c0_125 = arith.constant 0 : index
    %c0_126 = arith.constant 0 : index
    %230 = vector.load %arg1[%c5_124, %c0_125, %c0_126] : memref<6x8x32xbf16, #tpu.memory_space<vmem>>, vector<1x8x32xbf16>
    %231 = vector.shape_cast %230 : vector<1x8x32xbf16> to vector<8x32xbf16>
    %cst_127 = arith.constant dense<0.000000e+00> : vector<2x32xf32>
    %232 = tpu.matmul %229, %231, %cst_127 {dimension_numbers = #tpu.dot_dimension_numbers<[1], [0], [0], [1], [0, 0, 1, 1], [], []>} : vector<2x8xbf16>, vector<8x32xbf16>, vector<2x32xf32> -> vector<2x32xf32>
    %233 = vector.extract_strided_slice %228 {offsets = [0, 0], sizes = [1, 32], strides = [1, 1]} : vector<5x32xf32> to vector<1x32xf32>
    %234 = vector.broadcast %233 : vector<1x32xf32> to vector<2x32xf32>
    %235 = arith.addf %232, %234 : vector<2x32xf32>
    %cst_128 = arith.constant 0.000000e+00 : f32
    %236 = vector.broadcast %cst_128 : f32 to vector<2x32xf32>
    %237 = arith.maximumf %235, %236 : vector<2x32xf32>
    %238 = arith.truncf %237 : vector<2x32xf32> to vector<2x32xbf16>
    %c5_129 = arith.constant 5 : index
    %c0_130 = arith.constant 0 : index
    %c0_131 = arith.constant 0 : index
    %239 = vector.load %arg2[%c5_129, %c0_130, %c0_131] : memref<6x32x32xbf16, #tpu.memory_space<vmem>>, vector<1x32x32xbf16>
    %240 = vector.shape_cast %239 : vector<1x32x32xbf16> to vector<32x32xbf16>
    %cst_132 = arith.constant dense<0.000000e+00> : vector<2x32xf32>
    %241 = tpu.matmul %238, %240, %cst_132 {dimension_numbers = #tpu.dot_dimension_numbers<[1], [0], [0], [1], [0, 0, 1, 1], [], []>} : vector<2x32xbf16>, vector<32x32xbf16>, vector<2x32xf32> -> vector<2x32xf32>
    %242 = vector.extract_strided_slice %228 {offsets = [1, 0], sizes = [1, 32], strides = [1, 1]} : vector<5x32xf32> to vector<1x32xf32>
    %243 = vector.broadcast %242 : vector<1x32xf32> to vector<2x32xf32>
    %244 = arith.addf %241, %243 : vector<2x32xf32>
    %cst_133 = arith.constant 0.000000e+00 : f32
    %245 = vector.broadcast %cst_133 : f32 to vector<2x32xf32>
    %246 = arith.maximumf %244, %245 : vector<2x32xf32>
    %247 = arith.truncf %246 : vector<2x32xf32> to vector<2x32xbf16>
    %c5_134 = arith.constant 5 : index
    %c0_135 = arith.constant 0 : index
    %c0_136 = arith.constant 0 : index
    %248 = vector.load %arg3[%c5_134, %c0_135, %c0_136] : memref<6x32x16xbf16, #tpu.memory_space<vmem>>, vector<1x32x16xbf16>
    %249 = vector.shape_cast %248 : vector<1x32x16xbf16> to vector<32x16xbf16>
    %cst_137 = arith.constant dense<0.000000e+00> : vector<2x16xf32>
    %250 = tpu.matmul %247, %249, %cst_137 {dimension_numbers = #tpu.dot_dimension_numbers<[1], [0], [0], [1], [0, 0, 1, 1], [], []>} : vector<2x32xbf16>, vector<32x16xbf16>, vector<2x16xf32> -> vector<2x16xf32>
    %251 = vector.extract_strided_slice %228 {offsets = [2, 0], sizes = [1, 16], strides = [1, 1]} : vector<5x32xf32> to vector<1x16xf32>
    %252 = vector.broadcast %251 : vector<1x16xf32> to vector<2x16xf32>
    %253 = arith.addf %250, %252 : vector<2x16xf32>
    %254 = vector.extract_strided_slice %253 {offsets = [0, 8], sizes = [2, 8], strides = [1, 1]} : vector<2x16xf32> to vector<2x8xf32>
    %255 = arith.truncf %254 : vector<2x8xf32> to vector<2x8xbf16>
    %c5_138 = arith.constant 5 : index
    %c0_139 = arith.constant 0 : index
    %c0_140 = arith.constant 0 : index
    %256 = vector.load %arg5[%c5_138, %c0_139, %c0_140] : memref<6x8x8xbf16, #tpu.memory_space<vmem>>, vector<1x8x8xbf16>
    %257 = vector.shape_cast %256 : vector<1x8x8xbf16> to vector<8x8xbf16>
    %cst_141 = arith.constant dense<0.000000e+00> : vector<2x8xf32>
    %258 = tpu.matmul %255, %257, %cst_141 {dimension_numbers = #tpu.dot_dimension_numbers<[1], [0], [0], [1], [0, 0, 1, 1], [], []>} : vector<2x8xbf16>, vector<8x8xbf16>, vector<2x8xf32> -> vector<2x8xf32>
    %259 = vector.extract_strided_slice %228 {offsets = [4, 0], sizes = [1, 8], strides = [1, 1]} : vector<5x32xf32> to vector<1x8xf32>
    %260 = vector.broadcast %259 : vector<1x8xf32> to vector<2x8xf32>
    %261 = arith.addf %258, %260 : vector<2x8xf32>
    %262 = arith.addf %226, %261 : vector<2x8xf32>
    %c0_142 = arith.constant 0 : index
    %c0_143 = arith.constant 0 : index
    %263 = vector.load %arg7[%c0_142, %c0_143] : memref<2x8xf32, #tpu.memory_space<vmem>>, vector<2x8xf32>
    tpu.vector_store %arg7[%c0_142, %c0_143], %262 {strides = array<i32>} : memref<2x8xf32, #tpu.memory_space<vmem>>, vector<2x8xf32>,
    return
  }
}

</mosaic_0001>

<llo_original>
// kernel: tpu_custom_call.1
$region0: #{tpu_custom_call.1}
  #allocation0 [shape = 'u32[]', space=smem, size = 0x4, offset = 0x4, fixed_abs, tag = 'smem constant byte address 0x4 - core index']
  #allocation1 [shape = 'u32[72,128]{1,0:T(1,128)}', space=vmem, size = 0x9000, scoped, tag = 'internal scratch']
  %s0 = inlined_call_operand.vmem [shape: f32[2,8], index: 0, kind: input, shape index: {}]
  %s1 = inlined_call_operand.vmem [shape: bf16[6,8,32], index: 1, kind: input, shape index: {}]
  %s2 = inlined_call_operand.vmem [shape: bf16[6,32,32], index: 2, kind: input, shape index: {}]
  %s3 = inlined_call_operand.vmem [shape: bf16[6,32,16], index: 3, kind: input, shape index: {}]
  %s4 = inlined_call_operand.vmem [shape: bf16[6,8,8], index: 4, kind: input, shape index: {}]
  %s5 = inlined_call_operand.vmem [shape: bf16[6,8,8], index: 5, kind: input, shape index: {}]
  %s6 = inlined_call_operand.vmem [shape: f32[6,5,32], index: 6, kind: input, shape index: {}]
  %s7 = inlined_call_operand.hbm [shape: f32[2,8], index: 7, kind: output, shape index: {}]
  %s8 = sld [smem:[#allocation0]]
  $region38: #{tpu_custom_call.1} parent=0
    _
  %s10 = ssub.s32 1, %s8
  %s11 = scalar_select 0, %s10, %s8
  $region1: #{tpu_custom_call.1} parent=0
    #allocation2 [shape = 'u8[1024]{0}', space=vmem, size = 0x400, scoped, tag = 'output window, operand 0, single buffered']
    #allocation3 [shape = 's32[1]{0}', space=sflag, size = 0x4, scoped, tag = 'scoped memory for tpu_custom_call.1']
    %12 = vsyncpa [#allocation3], 0
    // Predicated region
    $region2: #{tpu_custom_call.1} parent=1 // pred_check
      _
    $region3: #{tpu_custom_call.1} parent=1 // pred_check_branch
      %14 = sbr.rel (0) target = $region5
    $region4: #{tpu_custom_call.1} parent=1 // pred_region
      _
    $region5: #{tpu_custom_call.1} parent=1 // pred_fallthru
      _
    // Predicated region
    $region6: #{tpu_custom_call.1} parent=1 // pred_check
      _
    $region7: #{tpu_custom_call.1} parent=1 // pred_check_branch
      %16 = sbr.rel (0) target = $region9
    $region8: #{tpu_custom_call.1} parent=1 // pred_region
      _
    $region9: #{tpu_custom_call.1} parent=1 // pred_fallthru
      _
    // Predicated region
    $region10: #{tpu_custom_call.1} parent=1 // pred_check
      _
    $region11: #{tpu_custom_call.1} parent=1 // pred_check_branch
      %18 = sbr.rel (0) target = $region13
    $region12: #{tpu_custom_call.1} parent=1 // pred_region
      _
    $region13: #{tpu_custom_call.1} parent=1 // pred_fallthru
      _
    // Predicated region
    $region14: #{tpu_custom_call.1} parent=1 // pred_check
      _
    $region15: #{tpu_custom_call.1} parent=1 // pred_check_branch
      %20 = sbr.rel (0) target = $region17
    $region16: #{tpu_custom_call.1} parent=1 // pred_region
      _
    $region17: #{tpu_custom_call.1} parent=1 // pred_fallthru
      _
    // Predicated region
    $region18: #{tpu_custom_call.1} parent=1 // pred_check
      _
    $region19: #{tpu_custom_call.1} parent=1 // pred_check_branch
      %22 = sbr.rel (0) target = $region21
    $region20: #{tpu_custom_call.1} parent=1 // pred_region
      _
    $region21: #{tpu_custom_call.1} parent=1 // pred_fallthru
      _
    // Predicated region
    $region22: #{tpu_custom_call.1} parent=1 // pred_check
      _
    $region23: #{tpu_custom_call.1} parent=1 // pred_check_branch
      %24 = sbr.rel (0) target = $region25
    $region24: #{tpu_custom_call.1} parent=1 // pred_region
      _
    $region25: #{tpu_custom_call.1} parent=1 // pred_fallthru
      _
    // Predicated region
    $region26: #{tpu_custom_call.1} parent=1 // pred_check
      _
    $region27: #{tpu_custom_call.1} parent=1 // pred_check_branch
      %26 = sbr.rel (0) target = $region29
    $region28: #{tpu_custom_call.1} parent=1 // pred_region
      _
    $region29: #{tpu_custom_call.1} parent=1 // pred_fallthru
      _
    %v28 = vld [vmem:[%s0] sm:$0x3]
    %v29 = vld [vmem:[%s6] sm:$0x1f]
    %v30 = vpack.c.bf16 %v28, %v28
    %v31 = vld [vmem:[%s1] sm:$0xf]
    %v32 = vperm.slane %v29, 0
    %vm33 = vcmask 64512
    %v35 = vsel %vm33, %v30, 0
    %vm37 = vcmask 1043456
    %v39 = vsel %vm37, %v31, 0
    %41 = vmatpush.bf16.msra.mxu0 0
    %42 = vmatpush.bf16.msra.mxu0 0
    %43 = vmatpush.bf16.msra.mxu0 0
    %44 = vmatpush.bf16.msra.mxu0 0
    %45 = vmatpush.bf16.msra.mxu0 0
    %46 = vmatpush.bf16.msra.mxu0 0
    %47 = vmatpush.bf16.msra.mxu0 0
    %48 = vmatpush.bf16.msra.mxu0 %v39
    %49 = vmatmul.bf16.gmra.mxu0 %v35
    %v50 = vpop.f32.mrf.mxu0
    %v51 = vadd.f32 %v32, %v50
    %v52 = vpop.f32.mrf.mxu0
    %53 = vdwg.mxu0
    %v54 = vmax.f32 %v51, 0.0
    %v55 = vpack.c.bf16 %v54, %v54
    %v56 = vld [vmem:[%s2] sm:$0xf]
    %v57 = vld [vmem:[%s2 + $0x4] sm:$0xf]
    %v58 = vld [vmem:[%s2 + $0x8] sm:$0xf]
    %v59 = vld [vmem:[%s2 + $0xc] sm:$0xf]
    %v60 = vperm.slane %v29, 1
    %v65 = vunpack.c.l.b16 %v56
    %v66 = vunpack.c.l.b16 %v57
    %v67 = vunpack.c.l.b16 %v58
    %v68 = vunpack.c.l.b16 %v59
    %v69 = vpack.c.b16 %v66, %v65
    %v70 = vpack.c.b16 %v68, %v67
    %vm73 = vcmask 261120
    %v75 = vsel %vm73, %v55, 0
    %77 = vmatpush.bf16.msra.mxu0 0
    %78 = vmatpush.bf16.msra.mxu0 0
    %79 = vmatpush.bf16.msra.mxu0 0
    %80 = vmatpush.bf16.msra.mxu0 0
    %81 = vmatpush.bf16.msra.mxu0 0
    %82 = vmatpush.bf16.msra.mxu0 0
    %83 = vmatpush.bf16.msra.mxu0 %v70
    %84 = vmatpush.bf16.msra.mxu0 %v69
    %85 = vmatmul.bf16.gmra.mxu0 %v75
    %v86 = vpop.f32.mrf.mxu0
    %v87 = vadd.f32 %v60, %v86
    %v88 = vpop.f32.mrf.mxu0
    %89 = vdwg.mxu0
    %v90 = vmax.f32 %v87, 0.0
    %v91 = vpack.c.bf16 %v90, %v90
    %v92 = vld [vmem:[%s3] sm:$0xf]
    %v93 = vld [vmem:[%s3 + $0x4] sm:$0xf]
    %v94 = vld [vmem:[%s3 + $0x8] sm:$0xf]
    %v95 = vld [vmem:[%s3 + $0xc] sm:$0xf]
    %v96 = vperm.slane %v29, 2
    %v101 = vunpack.c.l.b16 %v92
    %v102 = vunpack.c.l.b16 %v93
    %v103 = vunpack.c.l.b16 %v94
    %v104 = vunpack.c.l.b16 %v95
    %v105 = vpack.c.b16 %v102, %v101
    %v106 = vpack.c.b16 %v104, %v103
    %v110 = vsel %vm73, %v91, 0
    %112 = vmatpush.bf16.msra.mxu0 0
    %113 = vmatpush.bf16.msra.mxu0 0
    %114 = vmatpush.bf16.msra.mxu0 0
    %115 = vmatpush.bf16.msra.mxu0 0
    %116 = vmatpush.bf16.msra.mxu0 0
    %117 = vmatpush.bf16.msra.mxu0 0
    %118 = vmatpush.bf16.msra.mxu0 %v106
    %119 = vmatpush.bf16.msra.mxu0 %v105
    %120 = vmatmul.bf16.gmra.mxu0 %v110
    %v121 = vpop.f32.mrf.mxu0
    %v122 = vadd.f32 %v96, %v121
    %v123 = vpop.f32.mrf.mxu0
    %124 = vdwg.mxu0
    %v125 = vpack.c.bf16 %v122, %v122
    %v126 = vld [vmem:[%s4] sm:$0xf]
    %v127 = vperm.slane %v29, 3
    %v129 = vsel %vm33, %v125, 0
    %v132 = vsel %vm37, %v126, 0
    %134 = vmatpush.bf16.msra.mxu0 0
    %135 = vmatpush.bf16.msra.mxu0 0
    %136 = vmatpush.bf16.msra.mxu0 0
    %137 = vmatpush.bf16.msra.mxu0 0
    %138 = vmatpush.bf16.msra.mxu0 0
    %139 = vmatpush.bf16.msra.mxu0 0
    %140 = vmatpush.bf16.msra.mxu0 0
    %141 = vmatpush.bf16.msra.mxu0 %v132
    %142 = vmatmul.bf16.gmra.mxu0 %v129
    %v143 = vpop.f32.mrf.mxu0
    %v144 = vadd.f32 %v127, %v143
    %v145 = vpop.f32.mrf.mxu0
    %146 = vdwg.mxu0
    %v147 = vsub.f32 %v28, %v144
    %v148 = vld [vmem:[%s5] sm:$0xf]
    %v149 = vperm.slane %v29, 4
    %151 = vrot.lane.b32.xlu0 %v125, 120
    %v152 = vpop.permute.xlu0 %151
    %v154 = vsel %vm33, %v152, 0
    %v157 = vsel %vm37, %v148, 0
    %159 = vmatpush.bf16.msra.mxu0 0
    %160 = vmatpush.bf16.msra.mxu0 0
    %161 = vmatpush.bf16.msra.mxu0 0
    %162 = vmatpush.bf16.msra.mxu0 0
    %163 = vmatpush.bf16.msra.mxu0 0
    %164 = vmatpush.bf16.msra.mxu0 0
    %165 = vmatpush.bf16.msra.mxu0 0
    %166 = vmatpush.bf16.msra.mxu0 %v157
    %167 = vmatmul.bf16.gmra.mxu0 %v154
    %v168 = vpop.f32.mrf.mxu0
    %v169 = vadd.f32 %v149, %v168
    %v170 = vpop.f32.mrf.mxu0
    %171 = vdwg.mxu0
    %v172 = vadd.f32 %v169, 0.0
    %s173 = scalar_lea.vmem %s6, 8
    %v174 = vld [vmem:[%s173] sm:$0x1f]
    %v175 = vpack.c.bf16 %v147, %v147
    %s176 = scalar_lea.vmem %s1, 4
    %v177 = vld [vmem:[%s176] sm:$0xf]
    %v178 = vperm.slane %v174, 0
    %v180 = vsel %vm33, %v175, 0
    %v183 = vsel %vm37, %v177, 0
    %185 = vmatpush.bf16.msra.mxu0 0
    %186 = vmatpush.bf16.msra.mxu0 0
    %187 = vmatpush.bf16.msra.mxu0 0
    %188 = vmatpush.bf16.msra.mxu0 0
    %189 = vmatpush.bf16.msra.mxu0 0
    %190 = vmatpush.bf16.msra.mxu0 0
    %191 = vmatpush.bf16.msra.mxu0 0
    %192 = vmatpush.bf16.msra.mxu0 %v183
    %193 = vmatmul.bf16.gmra.mxu0 %v180
    %v194 = vpop.f32.mrf.mxu0
    %v195 = vadd.f32 %v178, %v194
    %v196 = vpop.f32.mrf.mxu0
    %197 = vdwg.mxu0
    %v198 = vmax.f32 %v195, 0.0
    %v199 = vpack.c.bf16 %v198, %v198
    %s200 = scalar_lea.vmem %s2, 16
    %v201 = vld [vmem:[%s200] sm:$0xf]
    %v202 = vld [vmem:[%s200 + $0x4] sm:$0xf]
    %v203 = vld [vmem:[%s200 + $0x8] sm:$0xf]
    %v204 = vld [vmem:[%s200 + $0xc] sm:$0xf]
    %v205 = vperm.slane %v174, 1
    %v210 = vunpack.c.l.b16 %v201
    %v211 = vunpack.c.l.b16 %v202
    %v212 = vunpack.c.l.b16 %v203
    %v213 = vunpack.c.l.b16 %v204
    %v214 = vpack.c.b16 %v211, %v210
    %v215 = vpack.c.b16 %v213, %v212
    %v219 = vsel %vm73, %v199, 0
    %221 = vmatpush.bf16.msra.mxu0 0
    %222 = vmatpush.bf16.msra.mxu0 0
    %223 = vmatpush.bf16.msra.mxu0 0
    %224 = vmatpush.bf16.msra.mxu0 0
    %225 = vmatpush.bf16.msra.mxu0 0
    %226 = vmatpush.bf16.msra.mxu0 0
    %227 = vmatpush.bf16.msra.mxu0 %v215
    %228 = vmatpush.bf16.msra.mxu0 %v214
    %229 = vmatmul.bf16.gmra.mxu0 %v219
    %v230 = vpop.f32.mrf.mxu0
    %v231 = vadd.f32 %v205, %v230
    %v232 = vpop.f32.mrf.mxu0
    %233 = vdwg.mxu0
    %v234 = vmax.f32 %v231, 0.0
    %v235 = vpack.c.bf16 %v234, %v234
    %s236 = scalar_lea.vmem %s3, 16
    %v237 = vld [vmem:[%s236] sm:$0xf]
    %v238 = vld [vmem:[%s236 + $0x4] sm:$0xf]
    %v239 = vld [vmem:[%s236 + $0x8] sm:$0xf]
    %v240 = vld [vmem:[%s236 + $0xc] sm:$0xf]
    %v241 = vperm.slane %v174, 2
    %v246 = vunpack.c.l.b16 %v237
    %v247 = vunpack.c.l.b16 %v238
    %v248 = vunpack.c.l.b16 %v239
    %v249 = vunpack.c.l.b16 %v240
    %v250 = vpack.c.b16 %v247, %v246
    %v251 = vpack.c.b16 %v249, %v248
    %v255 = vsel %vm73, %v235, 0
    %257 = vmatpush.bf16.msra.mxu0 0
    %258 = vmatpush.bf16.msra.mxu0 0
    %259 = vmatpush.bf16.msra.mxu0 0
    %260 = vmatpush.bf16.msra.mxu0 0
    %261 = vmatpush.bf16.msra.mxu0 0
    %262 = vmatpush.bf16.msra.mxu0 0
    %263 = vmatpush.bf16.msra.mxu0 %v251
    %264 = vmatpush.bf16.msra.mxu0 %v250
    %265 = vmatmul.bf16.gmra.mxu0 %v255
    %v266 = vpop.f32.mrf.mxu0
    %v267 = vadd.f32 %v241, %v266
    %v268 = vpop.f32.mrf.mxu0
    %269 = vdwg.mxu0
    %v270 = vpack.c.bf16 %v267, %v267
    %s271 = scalar_lea.vmem %s4, 4
    %v272 = vld [vmem:[%s271] sm:$0xf]
    %v273 = vperm.slane %v174, 3
    %v275 = vsel %vm33, %v270, 0
    %v278 = vsel %vm37, %v272, 0
    %280 = vmatpush.bf16.msra.mxu0 0
    %281 = vmatpush.bf16.msra.mxu0 0
    %282 = vmatpush.bf16.msra.mxu0 0
    %283 = vmatpush.bf16.msra.mxu0 0
    %284 = vmatpush.bf16.msra.mxu0 0
    %285 = vmatpush.bf16.msra.mxu0 0
    %286 = vmatpush.bf16.msra.mxu0 0
    %287 = vmatpush.bf16.msra.mxu0 %v278
    %288 = vmatmul.bf16.gmra.mxu0 %v275
    %v289 = vpop.f32.mrf.mxu0
    %v290 = vadd.f32 %v273, %v289
    %v291 = vpop.f32.mrf.mxu0
    %292 = vdwg.mxu0
    %v293 = vsub.f32 %v147, %v290
    %s294 = scalar_lea.vmem %s5, 4
    %v295 = vld [vmem:[%s294] sm:$0xf]
    %v296 = vperm.slane %v174, 4
    %298 = vrot.lane.b32.xlu0 %v270, 120
    %v299 = vpop.permute.xlu0 %298
    %v301 = vsel %vm33, %v299, 0
    %v304 = vsel %vm37, %v295, 0
    %306 = vmatpush.bf16.msra.mxu0 0
    %307 = vmatpush.bf16.msra.mxu0 0
    %308 = vmatpush.bf16.msra.mxu0 0
    %309 = vmatpush.bf16.msra.mxu0 0
    %310 = vmatpush.bf16.msra.mxu0 0
    %311 = vmatpush.bf16.msra.mxu0 0
    %312 = vmatpush.bf16.msra.mxu0 0
    %313 = vmatpush.bf16.msra.mxu0 %v304
    %314 = vmatmul.bf16.gmra.mxu0 %v301
    %v315 = vpop.f32.mrf.mxu0
    %v316 = vadd.f32 %v296, %v315
    %v317 = vpop.f32.mrf.mxu0
    %318 = vdwg.mxu0
    %v319 = vadd.f32 %v172, %v316
    %s320 = scalar_lea.vmem %s6, 16
    %v321 = vld [vmem:[%s320] sm:$0x1f]
    %v322 = vpack.c.bf16 %v293, %v293
    %s323 = scalar_lea.vmem %s1, 8
    %v324 = vld [vmem:[%s323] sm:$0xf]
    %v325 = vperm.slane %v321, 0
    %v327 = vsel %vm33, %v322, 0
    %v330 = vsel %vm37, %v324, 0
    %332 = vmatpush.bf16.msra.mxu0 0
    %333 = vmatpush.bf16.msra.mxu0 0
    %334 = vmatpush.bf16.msra.mxu0 0
    %335 = vmatpush.bf16.msra.mxu0 0
    %336 = vmatpush.bf16.msra.mxu0 0
    %337 = vmatpush.bf16.msra.mxu0 0
    %338 = vmatpush.bf16.msra.mxu0 0
    %339 = vmatpush.bf16.msra.mxu0 %v330
    %340 = vmatmul.bf16.gmra.mxu0 %v327
    %v341 = vpop.f32.mrf.mxu0
    %v342 = vadd.f32 %v325, %v341
    %v343 = vpop.f32.mrf.mxu0
    %344 = vdwg.mxu0
    %v345 = vmax.f32 %v342, 0.0
    %v346 = vpack.c.bf16 %v345, %v345
    %s347 = scalar_lea.vmem %s2, 32
    %v348 = vld [vmem:[%s347] sm:$0xf]
    %v349 = vld [vmem:[%s347 + $0x4] sm:$0xf]
    %v350 = vld [vmem:[%s347 + $0x8] sm:$0xf]
    %v351 = vld [vmem:[%s347 + $0xc] sm:$0xf]
    %v352 = vperm.slane %v321, 1
    %v357 = vunpack.c.l.b16 %v348
    %v358 = vunpack.c.l.b16 %v349
    %v359 = vunpack.c.l.b16 %v350
    %v360 = vunpack.c.l.b16 %v351
    %v361 = vpack.c.b16 %v358, %v357
    %v362 = vpack.c.b16 %v360, %v359
    %v366 = vsel %vm73, %v346, 0
    %368 = vmatpush.bf16.msra.mxu0 0
    %369 = vmatpush.bf16.msra.mxu0 0
    %370 = vmatpush.bf16.msra.mxu0 0
    %371 = vmatpush.bf16.msra.mxu0 0
    %372 = vmatpush.bf16.msra.mxu0 0
    %373 = vmatpush.bf16.msra.mxu0 0
    %374 = vmatpush.bf16.msra.mxu0 %v362
    %375 = vmatpush.bf16.msra.mxu0 %v361
    %376 = vmatmul.bf16.gmra.mxu0 %v366
    %v377 = vpop.f32.mrf.mxu0
    %v378 = vadd.f32 %v352, %v377
    %v379 = vpop.f32.mrf.mxu0
    %380 = vdwg.mxu0
    %v381 = vmax.f32 %v378, 0.0
    %v382 = vpack.c.bf16 %v381, %v381
    %s383 = scalar_lea.vmem %s3, 32
    %v384 = vld [vmem:[%s383] sm:$0xf]
    %v385 = vld [vmem:[%s383 + $0x4] sm:$0xf]
    %v386 = vld [vmem:[%s383 + $0x8] sm:$0xf]
    %v387 = vld [vmem:[%s383 + $0xc] sm:$0xf]
    %v388 = vperm.slane %v321, 2
    %v393 = vunpack.c.l.b16 %v384
    %v394 = vunpack.c.l.b16 %v385
    %v395 = vunpack.c.l.b16 %v386
    %v396 = vunpack.c.l.b16 %v387
    %v397 = vpack.c.b16 %v394, %v393
    %v398 = vpack.c.b16 %v396, %v395
    %v402 = vsel %vm73, %v382, 0
    %404 = vmatpush.bf16.msra.mxu0 0
    %405 = vmatpush.bf16.msra.mxu0 0
    %406 = vmatpush.bf16.msra.mxu0 0
    %407 = vmatpush.bf16.msra.mxu0 0
    %408 = vmatpush.bf16.msra.mxu0 0
    %409 = vmatpush.bf16.msra.mxu0 0
    %410 = vmatpush.bf16.msra.mxu0 %v398
    %411 = vmatpush.bf16.msra.mxu0 %v397
    %412 = vmatmul.bf16.gmra.mxu0 %v402
    %v413 = vpop.f32.mrf.mxu0
    %v414 = vadd.f32 %v388, %v413
    %v415 = vpop.f32.mrf.mxu0
    %416 = vdwg.mxu0
    %v417 = vpack.c.bf16 %v414, %v414
    %s418 = scalar_lea.vmem %s4, 8
    %v419 = vld [vmem:[%s418] sm:$0xf]
    %v420 = vperm.slane %v321, 3
    %v422 = vsel %vm33, %v417, 0
    %v425 = vsel %vm37, %v419, 0
    %427 = vmatpush.bf16.msra.mxu0 0
    %428 = vmatpush.bf16.msra.mxu0 0
    %429 = vmatpush.bf16.msra.mxu0 0
    %430 = vmatpush.bf16.msra.mxu0 0
    %431 = vmatpush.bf16.msra.mxu0 0
    %432 = vmatpush.bf16.msra.mxu0 0
    %433 = vmatpush.bf16.msra.mxu0 0
    %434 = vmatpush.bf16.msra.mxu0 %v425
    %435 = vmatmul.bf16.gmra.mxu0 %v422
    %v436 = vpop.f32.mrf.mxu0
    %v437 = vadd.f32 %v420, %v436
    %v438 = vpop.f32.mrf.mxu0
    %439 = vdwg.mxu0
    %v440 = vsub.f32 %v293, %v437
    %s441 = scalar_lea.vmem %s5, 8
    %v442 = vld [vmem:[%s441] sm:$0xf]
    %v443 = vperm.slane %v321, 4
    %445 = vrot.lane.b32.xlu0 %v417, 120
    %v446 = vpop.permute.xlu0 %445
    %v448 = vsel %vm33, %v446, 0
    %v451 = vsel %vm37, %v442, 0
    %453 = vmatpush.bf16.msra.mxu0 0
    %454 = vmatpush.bf16.msra.mxu0 0
    %455 = vmatpush.bf16.msra.mxu0 0
    %456 = vmatpush.bf16.msra.mxu0 0
    %457 = vmatpush.bf16.msra.mxu0 0
    %458 = vmatpush.bf16.msra.mxu0 0
    %459 = vmatpush.bf16.msra.mxu0 0
    %460 = vmatpush.bf16.msra.mxu0 %v451
    %461 = vmatmul.bf16.gmra.mxu0 %v448
    %v462 = vpop.f32.mrf.mxu0
    %v463 = vadd.f32 %v443, %v462
    %v464 = vpop.f32.mrf.mxu0
    %465 = vdwg.mxu0
    %v466 = vadd.f32 %v319, %v463
    %s467 = scalar_lea.vmem %s6, 24
    %v468 = vld [vmem:[%s467] sm:$0x1f]
    %v469 = vpack.c.bf16 %v440, %v440
    %s470 = scalar_lea.vmem %s1, 12
    %v471 = vld [vmem:[%s470] sm:$0xf]
    %v472 = vperm.slane %v468, 0
    %v474 = vsel %vm33, %v469, 0
    %v477 = vsel %vm37, %v471, 0
    %479 = vmatpush.bf16.msra.mxu0 0
    %480 = vmatpush.bf16.msra.mxu0 0
    %481 = vmatpush.bf16.msra.mxu0 0
    %482 = vmatpush.bf16.msra.mxu0 0
    %483 = vmatpush.bf16.msra.mxu0 0
    %484 = vmatpush.bf16.msra.mxu0 0
    %485 = vmatpush.bf16.msra.mxu0 0
    %486 = vmatpush.bf16.msra.mxu0 %v477
    %487 = vmatmul.bf16.gmra.mxu0 %v474
    %v488 = vpop.f32.mrf.mxu0
    %v489 = vadd.f32 %v472, %v488
    %v490 = vpop.f32.mrf.mxu0
    %491 = vdwg.mxu0
    %v492 = vmax.f32 %v489, 0.0
    %v493 = vpack.c.bf16 %v492, %v492
    %s494 = scalar_lea.vmem %s2, 48
    %v495 = vld [vmem:[%s494] sm:$0xf]
    %v496 = vld [vmem:[%s494 + $0x4] sm:$0xf]
    %v497 = vld [vmem:[%s494 + $0x8] sm:$0xf]
    %v498 = vld [vmem:[%s494 + $0xc] sm:$0xf]
    %v499 = vperm.slane %v468, 1
    %v504 = vunpack.c.l.b16 %v495
    %v505 = vunpack.c.l.b16 %v496
    %v506 = vunpack.c.l.b16 %v497
    %v507 = vunpack.c.l.b16 %v498
    %v508 = vpack.c.b16 %v505, %v504
    %v509 = vpack.c.b16 %v507, %v506
    %v513 = vsel %vm73, %v493, 0
    %515 = vmatpush.bf16.msra.mxu0 0
    %516 = vmatpush.bf16.msra.mxu0 0
    %517 = vmatpush.bf16.msra.mxu0 0
    %518 = vmatpush.bf16.msra.mxu0 0
    %519 = vmatpush.bf16.msra.mxu0 0
    %520 = vmatpush.bf16.msra.mxu0 0
    %521 = vmatpush.bf16.msra.mxu0 %v509
    %522 = vmatpush.bf16.msra.mxu0 %v508
    %523 = vmatmul.bf16.gmra.mxu0 %v513
    %v524 = vpop.f32.mrf.mxu0
    %v525 = vadd.f32 %v499, %v524
    %v526 = vpop.f32.mrf.mxu0
    %527 = vdwg.mxu0
    %v528 = vmax.f32 %v525, 0.0
    %v529 = vpack.c.bf16 %v528, %v528
    %s530 = scalar_lea.vmem %s3, 48
    %v531 = vld [vmem:[%s530] sm:$0xf]
    %v532 = vld [vmem:[%s530 + $0x4] sm:$0xf]
    %v533 = vld [vmem:[%s530 + $0x8] sm:$0xf]
    %v534 = vld [vmem:[%s530 + $0xc] sm:$0xf]
    %v535 = vperm.slane %v468, 2
    %v540 = vunpack.c.l.b16 %v531
    %v541 = vunpack.c.l.b16 %v532
    %v542 = vunpack.c.l.b16 %v533
    %v543 = vunpack.c.l.b16 %v534
    %v544 = vpack.c.b16 %v541, %v540
    %v545 = vpack.c.b16 %v543, %v542
    %v549 = vsel %vm73, %v529, 0
    %551 = vmatpush.bf16.msra.mxu0 0
    %552 = vmatpush.bf16.msra.mxu0 0
    %553 = vmatpush.bf16.msra.mxu0 0
    %554 = vmatpush.bf16.msra.mxu0 0
    %555 = vmatpush.bf16.msra.mxu0 0
    %556 = vmatpush.bf16.msra.mxu0 0
    %557 = vmatpush.bf16.msra.mxu0 %v545
    %558 = vmatpush.bf16.msra.mxu0 %v544
    %559 = vmatmul.bf16.gmra.mxu0 %v549
    %v560 = vpop.f32.mrf.mxu0
    %v561 = vadd.f32 %v535, %v560
    %v562 = vpop.f32.mrf.mxu0
    %563 = vdwg.mxu0
    %v564 = vpack.c.bf16 %v561, %v561
    %s565 = scalar_lea.vmem %s4, 12
    %v566 = vld [vmem:[%s565] sm:$0xf]
    %v567 = vperm.slane %v468, 3
    %v569 = vsel %vm33, %v564, 0
    %v572 = vsel %vm37, %v566, 0
    %574 = vmatpush.bf16.msra.mxu0 0
    %575 = vmatpush.bf16.msra.mxu0 0
    %576 = vmatpush.bf16.msra.mxu0 0
    %577 = vmatpush.bf16.msra.mxu0 0
    %578 = vmatpush.bf16.msra.mxu0 0
    %579 = vmatpush.bf16.msra.mxu0 0
    %580 = vmatpush.bf16.msra.mxu0 0
    %581 = vmatpush.bf16.msra.mxu0 %v572
    %582 = vmatmul.bf16.gmra.mxu0 %v569
    %v583 = vpop.f32.mrf.mxu0
    %v584 = vadd.f32 %v567, %v583
    %v585 = vpop.f32.mrf.mxu0
    %586 = vdwg.mxu0
    %v587 = vsub.f32 %v440, %v584
    %s588 = scalar_lea.vmem %s5, 12
    %v589 = vld [vmem:[%s588] sm:$0xf]
    %v590 = vperm.slane %v468, 4
    %592 = vrot.lane.b32.xlu0 %v564, 120
    %v593 = vpop.permute.xlu0 %592
    %v595 = vsel %vm33, %v593, 0
    %v598 = vsel %vm37, %v589, 0
    %600 = vmatpush.bf16.msra.mxu0 0
    %601 = vmatpush.bf16.msra.mxu0 0
    %602 = vmatpush.bf16.msra.mxu0 0
    %603 = vmatpush.bf16.msra.mxu0 0
    %604 = vmatpush.bf16.msra.mxu0 0
    %605 = vmatpush.bf16.msra.mxu0 0
    %606 = vmatpush.bf16.msra.mxu0 0
    %607 = vmatpush.bf16.msra.mxu0 %v598
    %608 = vmatmul.bf16.gmra.mxu0 %v595
    %v609 = vpop.f32.mrf.mxu0
    %v610 = vadd.f32 %v590, %v609
    %v611 = vpop.f32.mrf.mxu0
    %612 = vdwg.mxu0
    %v613 = vadd.f32 %v466, %v610
    %s614 = scalar_lea.vmem %s6, 32
    %v615 = vld [vmem:[%s614] sm:$0x1f]
    %v616 = vpack.c.bf16 %v587, %v587
    %s617 = scalar_lea.vmem %s1, 16
    %v618 = vld [vmem:[%s617] sm:$0xf]
    %v619 = vperm.slane %v615, 0
    %v621 = vsel %vm33, %v616, 0
    %v624 = vsel %vm37, %v618, 0
    %626 = vmatpush.bf16.msra.mxu0 0
    %627 = vmatpush.bf16.msra.mxu0 0
    %628 = vmatpush.bf16.msra.mxu0 0
    %629 = vmatpush.bf16.msra.mxu0 0
    %630 = vmatpush.bf16.msra.mxu0 0
    %631 = vmatpush.bf16.msra.mxu0 0
    %632 = vmatpush.bf16.msra.mxu0 0
    %633 = vmatpush.bf16.msra.mxu0 %v624
    %634 = vmatmul.bf16.gmra.mxu0 %v621
    %v635 = vpop.f32.mrf.mxu0
    %v636 = vadd.f32 %v619, %v635
    %v637 = vpop.f32.mrf.mxu0
    %638 = vdwg.mxu0
    %v639 = vmax.f32 %v636, 0.0
    %v640 = vpack.c.bf16 %v639, %v639
    %s641 = scalar_lea.vmem %s2, 64
    %v642 = vld [vmem:[%s641] sm:$0xf]
    %v643 = vld [vmem:[%s641 + $0x4] sm:$0xf]
    %v644 = vld [vmem:[%s641 + $0x8] sm:$0xf]
    %v645 = vld [vmem:[%s641 + $0xc] sm:$0xf]
    %v646 = vperm.slane %v615, 1
    %v651 = vunpack.c.l.b16 %v642
    %v652 = vunpack.c.l.b16 %v643
    %v653 = vunpack.c.l.b16 %v644
    %v654 = vunpack.c.l.b16 %v645
    %v655 = vpack.c.b16 %v652, %v651
    %v656 = vpack.c.b16 %v654, %v653
    %v660 = vsel %vm73, %v640, 0
    %662 = vmatpush.bf16.msra.mxu0 0
    %663 = vmatpush.bf16.msra.mxu0 0
    %664 = vmatpush.bf16.msra.mxu0 0
    %665 = vmatpush.bf16.msra.mxu0 0
    %666 = vmatpush.bf16.msra.mxu0 0
    %667 = vmatpush.bf16.msra.mxu0 0
    %668 = vmatpush.bf16.msra.mxu0 %v656
    %669 = vmatpush.bf16.msra.mxu0 %v655
    %670 = vmatmul.bf16.gmra.mxu0 %v660
    %v671 = vpop.f32.mrf.mxu0
    %v672 = vadd.f32 %v646, %v671
    %v673 = vpop.f32.mrf.mxu0
    %674 = vdwg.mxu0
    %v675 = vmax.f32 %v672, 0.0
    %v676 = vpack.c.bf16 %v675, %v675
    %s677 = scalar_lea.vmem %s3, 64
    %v678 = vld [vmem:[%s677] sm:$0xf]
    %v679 = vld [vmem:[%s677 + $0x4] sm:$0xf]
    %v680 = vld [vmem:[%s677 + $0x8] sm:$0xf]
    %v681 = vld [vmem:[%s677 + $0xc] sm:$0xf]
    %v682 = vperm.slane %v615, 2
    %v687 = vunpack.c.l.b16 %v678
    %v688 = vunpack.c.l.b16 %v679
    %v689 = vunpack.c.l.b16 %v680
    %v690 = vunpack.c.l.b16 %v681
    %v691 = vpack.c.b16 %v688, %v687
    %v692 = vpack.c.b16 %v690, %v689
    %v696 = vsel %vm73, %v676, 0
    %698 = vmatpush.bf16.msra.mxu0 0
    %699 = vmatpush.bf16.msra.mxu0 0
    %700 = vmatpush.bf16.msra.mxu0 0
    %701 = vmatpush.bf16.msra.mxu0 0
    %702 = vmatpush.bf16.msra.mxu0 0
    %703 = vmatpush.bf16.msra.mxu0 0
    %704 = vmatpush.bf16.msra.mxu0 %v692
    %705 = vmatpush.bf16.msra.mxu0 %v691
    %706 = vmatmul.bf16.gmra.mxu0 %v696
    %v707 = vpop.f32.mrf.mxu0
    %v708 = vadd.f32 %v682, %v707
    %v709 = vpop.f32.mrf.mxu0
    %710 = vdwg.mxu0
    %v711 = vpack.c.bf16 %v708, %v708
    %s712 = scalar_lea.vmem %s4, 16
    %v713 = vld [vmem:[%s712] sm:$0xf]
    %v714 = vperm.slane %v615, 3
    %v716 = vsel %vm33, %v711, 0
    %v719 = vsel %vm37, %v713, 0
    %721 = vmatpush.bf16.msra.mxu0 0
    %722 = vmatpush.bf16.msra.mxu0 0
    %723 = vmatpush.bf16.msra.mxu0 0
    %724 = vmatpush.bf16.msra.mxu0 0
    %725 = vmatpush.bf16.msra.mxu0 0
    %726 = vmatpush.bf16.msra.mxu0 0
    %727 = vmatpush.bf16.msra.mxu0 0
    %728 = vmatpush.bf16.msra.mxu0 %v719
    %729 = vmatmul.bf16.gmra.mxu0 %v716
    %v730 = vpop.f32.mrf.mxu0
    %v731 = vadd.f32 %v714, %v730
    %v732 = vpop.f32.mrf.mxu0
    %733 = vdwg.mxu0
    %v734 = vsub.f32 %v587, %v731
    %s735 = scalar_lea.vmem %s5, 16
    %v736 = vld [vmem:[%s735] sm:$0xf]
    %v737 = vperm.slane %v615, 4
    %739 = vrot.lane.b32.xlu0 %v711, 120
    %v740 = vpop.permute.xlu0 %739
    %v742 = vsel %vm33, %v740, 0
    %v745 = vsel %vm37, %v736, 0
    %747 = vmatpush.bf16.msra.mxu0 0
    %748 = vmatpush.bf16.msra.mxu0 0
    %749 = vmatpush.bf16.msra.mxu0 0
    %750 = vmatpush.bf16.msra.mxu0 0
    %751 = vmatpush.bf16.msra.mxu0 0
    %752 = vmatpush.bf16.msra.mxu0 0
    %753 = vmatpush.bf16.msra.mxu0 0
    %754 = vmatpush.bf16.msra.mxu0 %v745
    %755 = vmatmul.bf16.gmra.mxu0 %v742
    %v756 = vpop.f32.mrf.mxu0
    %v757 = vadd.f32 %v737, %v756
    %v758 = vpop.f32.mrf.mxu0
    %759 = vdwg.mxu0
    %v760 = vadd.f32 %v613, %v757
    %s761 = scalar_lea.vmem %s6, 40
    %v762 = vld [vmem:[%s761] sm:$0x1f]
    %v763 = vpack.c.bf16 %v734, %v734
    %s764 = scalar_lea.vmem %s1, 20
    %v765 = vld [vmem:[%s764] sm:$0xf]
    %v766 = vperm.slane %v762, 0
    %v768 = vsel %vm33, %v763, 0
    %v771 = vsel %vm37, %v765, 0
    %773 = vmatpush.bf16.msra.mxu0 0
    %774 = vmatpush.bf16.msra.mxu0 0
    %775 = vmatpush.bf16.msra.mxu0 0
    %776 = vmatpush.bf16.msra.mxu0 0
    %777 = vmatpush.bf16.msra.mxu0 0
    %778 = vmatpush.bf16.msra.mxu0 0
    %779 = vmatpush.bf16.msra.mxu0 0
    %780 = vmatpush.bf16.msra.mxu0 %v771
    %781 = vmatmul.bf16.gmra.mxu0 %v768
    %v782 = vpop.f32.mrf.mxu0
    %v783 = vadd.f32 %v766, %v782
    %v784 = vpop.f32.mrf.mxu0
    %785 = vdwg.mxu0
    %v786 = vmax.f32 %v783, 0.0
    %v787 = vpack.c.bf16 %v786, %v786
    %s788 = scalar_lea.vmem %s2, 80
    %v789 = vld [vmem:[%s788] sm:$0xf]
    %v790 = vld [vmem:[%s788 + $0x4] sm:$0xf]
    %v791 = vld [vmem:[%s788 + $0x8] sm:$0xf]
    %v792 = vld [vmem:[%s788 + $0xc] sm:$0xf]
    %v793 = vperm.slane %v762, 1
    %v798 = vunpack.c.l.b16 %v789
    %v799 = vunpack.c.l.b16 %v790
    %v800 = vunpack.c.l.b16 %v791
    %v801 = vunpack.c.l.b16 %v792
    %v802 = vpack.c.b16 %v799, %v798
    %v803 = vpack.c.b16 %v801, %v800
    %v807 = vsel %vm73, %v787, 0
    %809 = vmatpush.bf16.msra.mxu0 0
    %810 = vmatpush.bf16.msra.mxu0 0
    %811 = vmatpush.bf16.msra.mxu0 0
    %812 = vmatpush.bf16.msra.mxu0 0
    %813 = vmatpush.bf16.msra.mxu0 0
    %814 = vmatpush.bf16.msra.mxu0 0
    %815 = vmatpush.bf16.msra.mxu0 %v803
    %816 = vmatpush.bf16.msra.mxu0 %v802
    %817 = vmatmul.bf16.gmra.mxu0 %v807
    %v818 = vpop.f32.mrf.mxu0
    %v819 = vadd.f32 %v793, %v818
    %v820 = vpop.f32.mrf.mxu0
    %821 = vdwg.mxu0
    %v822 = vmax.f32 %v819, 0.0
    %v823 = vpack.c.bf16 %v822, %v822
    %s824 = scalar_lea.vmem %s3, 80
    %v825 = vld [vmem:[%s824] sm:$0xf]
    %v826 = vld [vmem:[%s824 + $0x4] sm:$0xf]
    %v827 = vld [vmem:[%s824 + $0x8] sm:$0xf]
    %v828 = vld [vmem:[%s824 + $0xc] sm:$0xf]
    %v829 = vperm.slane %v762, 2
    %v834 = vunpack.c.l.b16 %v825
    %v835 = vunpack.c.l.b16 %v826
    %v836 = vunpack.c.l.b16 %v827
    %v837 = vunpack.c.l.b16 %v828
    %v838 = vpack.c.b16 %v835, %v834
    %v839 = vpack.c.b16 %v837, %v836
    %v843 = vsel %vm73, %v823, 0
    %845 = vmatpush.bf16.msra.mxu0 0
    %846 = vmatpush.bf16.msra.mxu0 0
    %847 = vmatpush.bf16.msra.mxu0 0
    %848 = vmatpush.bf16.msra.mxu0 0
    %849 = vmatpush.bf16.msra.mxu0 0
    %850 = vmatpush.bf16.msra.mxu0 0
    %851 = vmatpush.bf16.msra.mxu0 %v839
    %852 = vmatpush.bf16.msra.mxu0 %v838
    %853 = vmatmul.bf16.gmra.mxu0 %v843
    %v854 = vpop.f32.mrf.mxu0
    %v855 = vadd.f32 %v829, %v854
    %v856 = vpop.f32.mrf.mxu0
    %857 = vdwg.mxu0
    %v858 = vpack.c.bf16 %v855, %v855
    %s859 = scalar_lea.vmem %s5, 20
    %v860 = vld [vmem:[%s859] sm:$0xf]
    %v861 = vperm.slane %v762, 4
    %863 = vrot.lane.b32.xlu0 %v858, 120
    %v864 = vpop.permute.xlu0 %863
    %v866 = vsel %vm33, %v864, 0
    %v869 = vsel %vm37, %v860, 0
    %871 = vmatpush.bf16.msra.mxu0 0
    %872 = vmatpush.bf16.msra.mxu0 0
    %873 = vmatpush.bf16.msra.mxu0 0
    %874 = vmatpush.bf16.msra.mxu0 0
    %875 = vmatpush.bf16.msra.mxu0 0
    %876 = vmatpush.bf16.msra.mxu0 0
    %877 = vmatpush.bf16.msra.mxu0 0
    %878 = vmatpush.bf16.msra.mxu0 %v869
    %879 = vmatmul.bf16.gmra.mxu0 %v866
    %v880 = vpop.f32.mrf.mxu0
    %v881 = vadd.f32 %v861, %v880
    %v882 = vpop.f32.mrf.mxu0
    %883 = vdwg.mxu0
    %v884 = vadd.f32 %v760, %v881
    %vm885 = vcmask 58368
    %886 = vst.msk [vmem:[#allocation2] sm:$0x3] %vm885, %v884
    // Predicated region
    $region30: #{tpu_custom_call.1} parent=1 // pred_check
      _
    $region31: #{tpu_custom_call.1} parent=1 // pred_check_branch
      %888 = sbr.rel (0) target = $region33
    $region32: #{tpu_custom_call.1} parent=1 // pred_region
      %890 = vsyncadd [#allocation3], 0
      %s892 = sshll.u32 [#allocation2], 4
      %s893 = int_to_ptr.vmem [resolvable:$true] %s892
      %s894 = sshll.u32 %s7, 4
      %s895 = int_to_ptr.hbm [resolvable:$true] %s894
      %897 = dma.vmem_to_hbm [thread:$0]  %s893, 32, %s895, [#allocation3]
    $region33: #{tpu_custom_call.1} parent=1 // pred_fallthru
      _
    // Predicated region
    $region34: #{tpu_custom_call.1} parent=1 // pred_check
      _
    $region35: #{tpu_custom_call.1} parent=1 // pred_check_branch
      %899 = sbr.rel (0) target = $region37
    $region36: #{tpu_custom_call.1} parent=1 // pred_region
      %901 = dma.done [#allocation3], 32
    $region37: #{tpu_custom_call.1} parent=1 // pred_fallthru
      _
    %902 = vsyncpa [#allocation3], 1

</llo_original>
